<compile_context>
chip_gen: v5e
topology: v5e:2x2
jax: 0.10.0
libtpu: 0.0.40
codegen_flags: <defaults>
</compile_context>

<pallas_src>
import numpy as np
import jax
import jax.numpy as jnp
from jax import lax
from jax.experimental import pallas as pl
from jax.experimental.pallas import tpu as pltpu

NEG_SLOPE = 0.01   # nn.LeakyReLU default
LN_EPS = 1e-5      # nn.LayerNorm default
KPAD = 128         # conv1 contraction dim 30*3=90 zero-padded to a full lane tile


def _leaky(x):
    return jnp.where(x > 0, x, NEG_SLOPE * x)


# --------------------------------------------------------------------------
# Kernel A: conv1 + LeakyReLU + LayerNorm + conv2 (8-tap) + LeakyReLU
#           + LSTM input projection (both directions, biases folded in)
# --------------------------------------------------------------------------
def conv_stream_kernel(p_ref, w1_ref, b1_ref, g_ref, bt_ref, w2_ref, b2_ref,
                       wih_ref, bih_ref, gx_ref):
    nb = p_ref.shape[1]           # batch
    T = gx_ref.shape[2]           # conv2 output length == LSTM sequence length
    w1 = w1_ref[0]                # (128, 64), padded rows are zero
    b1 = b1_ref[0]                # (1, 64)
    ga = g_ref[0]                 # (L1, 64)
    be = bt_ref[0]                # (L1, 64)
    b2 = b2_ref[0]                # (1, 128)
    wih = wih_ref[...]            # (128, 8H)  [fwd gates | bwd gates]
    bih = bih_ref[...]            # (1, 8H)    combined b_ih + b_hh, both dirs

    for b in range(nb):           # static unroll: per-element LayerNorm stats
        p = p_ref[0, b]                                              # (L1, 128)
        y1 = jnp.dot(p, w1, preferred_element_type=jnp.float32) + b1
        y1 = _leaky(y1)
        m = jnp.mean(y1)
        v = jnp.mean(jnp.square(y1 - m))
        y1 = (y1 - m) * lax.rsqrt(v + LN_EPS) * ga + be              # (L1, 64)

        acc = jnp.zeros((T, b2.shape[1]), jnp.float32)
        for d in range(8):                                           # conv2 taps
            acc = acc + jnp.dot(y1[d:d + T, :], w2_ref[0, d],
                                preferred_element_type=jnp.float32)
        y2 = _leaky(acc + b2)                                        # (T, 128)

        # LSTM input projection for both directions, hoisted out of the recurrence.
        gx = jnp.dot(y2, wih, preferred_element_type=jnp.float32) + bih   # (T, 8H)
        gx_ref[0, b] = gx        # contiguous, lane-dense store


# --------------------------------------------------------------------------
# Kernel B: bidirectional LSTM recurrence (directions interleaved) + fused fc1
# --------------------------------------------------------------------------
def bilstm_fc1_kernel(gx_ref, whh_f_ref, whh_b_ref, fc1w_ref, fc1b_ref, o_ref):
    T = gx_ref.shape[1]
    nb = gx_ref.shape[2]
    H = whh_f_ref.shape[0]
    G = 4 * H
    N = o_ref.shape[2]            # fc1 out_features = 128
    whh_f = whh_f_ref[...]        # (H, 4H)
    whh_b = whh_b_ref[...]        # (H, 4H)

    def step(t, carry):
        hf, cf, hb, cb, acc = carry
        # Single dynamic read per step; layout pre-rearranged so both halves are used:
        #   x[:, :G] = fwd precomputed gates at position t
        #   x[:, G:] = bwd precomputed gates at position T-1-t
        x = gx_ref[0, t]          # (B, 8H)
        gf = x[:, :G] + jnp.dot(hf, whh_f, preferred_element_type=jnp.float32)
        gb = x[:, G:] + jnp.dot(hb, whh_b, preferred_element_type=jnp.float32)

        i_f = jax.nn.sigmoid(gf[:, 0:H])
        f_f = jax.nn.sigmoid(gf[:, H:2 * H])
        g_f = jnp.tanh(gf[:, 2 * H:3 * H])
        o_f = jax.nn.sigmoid(gf[:, 3 * H:])
        cf = f_f * cf + i_f * g_f
        hf = o_f * jnp.tanh(cf)

        i_b = jax.nn.sigmoid(gb[:, 0:H])
        f_b = jax.nn.sigmoid(gb[:, H:2 * H])
        g_b = jnp.tanh(gb[:, 2 * H:3 * H])
        o_b = jax.nn.sigmoid(gb[:, 3 * H:])
        cb = f_b * cb + i_b * g_b
        hb = o_b * jnp.tanh(cb)

        # Fused fc1: lstm_out is never materialized.  fc1 weights are stored
        # pre-rearranged: rows [:H] = fwd weights for time t, rows [H:] = bwd
        # weights for time T-1-t, so the single (2H,128) read is fully used.
        w_t = fc1w_ref[0, t]      # (2H, 128)
        acc = (acc
               + jnp.dot(hf, w_t[:H, :], preferred_element_type=jnp.float32)
               + jnp.dot(hb, w_t[H:, :], preferred_element_type=jnp.float32))
        return hf, cf, hb, cb, acc

    z = jnp.zeros((nb, H), jnp.float32)
    acc0 = jnp.zeros((nb, N), jnp.float32)
    _, _, _, _, acc = lax.fori_loop(0, T, step, (z, z, z, z, acc0))
    # TODO(synk): nn.Dropout(0.25) / LSTM inter-layer dropout are identity in eval mode.
    o_ref[0] = _leaky(acc + fc1b_ref[0])


# --------------------------------------------------------------------------
# Kernel C: fc2 over concatenated stream features
# --------------------------------------------------------------------------
def fc2_kernel(t_ref, w_ref, b_ref, o_ref):
    y = jnp.dot(t_ref[0], w_ref[0], preferred_element_type=jnp.float32)
    y = y + jnp.dot(t_ref[1], w_ref[1], preferred_element_type=jnp.float32)
    o_ref[...] = y + b_ref[...]


# --------------------------------------------------------------------------
# JAX-side glue
# --------------------------------------------------------------------------
def build_conv1_patches(x):
    """x: (B, R, 6) -> im2col patches (2, B, L1, 128) for conv1, K padded 90->128."""
    B, R, _ = x.shape
    k = 30
    L1 = R - k + 1
    streams = []
    for s in range(2):
        xi = x[:, :, 3 * s:3 * (s + 1)]                               # (B, R, 3)
        cols = jnp.stack([xi[:, d:d + L1, :] for d in range(k)], axis=2)  # (B,L1,30,3)
        streams.append(cols.reshape(B, L1, k * 3))
    p = jnp.stack(streams, axis=0)                                    # (2, B, L1, 90)
    return jnp.pad(p, ((0, 0), (0, 0), (0, 0), (0, KPAD - k * 3)))


def forward(x, params):
    """x: (B, num_rows, num_columns) -> (B, num_classes)."""
    B, R, _ = x.shape
    L1 = R - 29
    T = L1 - 7
    H = params["whh_f"].shape[0]
    G = 4 * H
    C = params["fc2_b"].shape[1]

    p1 = build_conv1_patches(x)                                       # (2, B, L1, 128)

    gx = pl.pallas_call(
        conv_stream_kernel,
        out_shape=jax.ShapeDtypeStruct((2, B, T, 2 * G), jnp.float32),
        grid=(2,),
        in_specs=[
            pl.BlockSpec((1, B, L1, KPAD), lambda s: (s, 0, 0, 0)),
            pl.BlockSpec((1, KPAD, 64), lambda s: (s, 0, 0)),
            pl.BlockSpec((1, 1, 64), lambda s: (s, 0, 0)),
            pl.BlockSpec((1, L1, 64), lambda s: (s, 0, 0)),
            pl.BlockSpec((1, L1, 64), lambda s: (s, 0, 0)),
            pl.BlockSpec((1, 8, 64, 128), lambda s: (s, 0, 0, 0)),
            pl.BlockSpec((1, 1, 128), lambda s: (s, 0, 0)),
            pl.BlockSpec((128, 2 * G), lambda s: (0, 0)),
            pl.BlockSpec((1, 2 * G), lambda s: (0, 0)),
        ],
        out_specs=pl.BlockSpec((1, B, T, 2 * G), lambda s: (s, 0, 0, 0)),
        compiler_params=pltpu.CompilerParams(dimension_semantics=("parallel",)),
    )(p1, params["w1p"], params["b1"], params["ln_g"], params["ln_b"],
      params["w2t"], params["b2"], params["wih"], params["bih"])

    # Cheap XLA rearrangement (gx is small vs. fc1 weights): time-reverse the
    # backward-direction gate half and go time-major so the recurrent kernel
    # does one contiguous leading-dim dynamic read per step.
    gxr = jnp.concatenate([gx[..., :G], jnp.flip(gx[..., G:], axis=2)], axis=-1)
    gxr = jnp.swapaxes(gxr, 1, 2)                                     # (2, T, B, 8H)

    # TODO(synk): at production size (num_rows=512, hidden=256) the per-stream fc1
    # weight (T*2H x 128 ~ 125 MB) must be K-tiled / streamed via manual DMA.
    t_out = pl.pallas_call(
        bilstm_fc1_kernel,
        out_shape=jax.ShapeDtypeStruct((2, B, 128), jnp.float32),
        grid=(2,),
        in_specs=[
            pl.BlockSpec((1, T, B, 2 * G), lambda s: (s, 0, 0, 0)),
            pl.BlockSpec((H, G), lambda s: (0, 0)),
            pl.BlockSpec((H, G), lambda s: (0, 0)),
            pl.BlockSpec((1, T, 2 * H, 128), lambda s: (s, 0, 0, 0)),
            pl.BlockSpec((1, 1, 128), lambda s: (s, 0, 0)),
        ],
        out_specs=pl.BlockSpec((1, B, 128), lambda s: (s, 0, 0)),
        compiler_params=pltpu.CompilerParams(dimension_semantics=("parallel",)),
    )(gxr, params["whh_f"], params["whh_b"], params["fc1w"], params["fc1b"])

    out = pl.pallas_call(
        fc2_kernel,
        out_shape=jax.ShapeDtypeStruct((B, C), jnp.float32),
    )(t_out, params["fc2_w"], params["fc2_b"])
    return out


# --------------------------------------------------------------------------
# Parameters (random, but laid out exactly like the PyTorch module's weights,
# except fc1 weights which are stored pre-rearranged for the fused recurrence)
# --------------------------------------------------------------------------
def init_params(key, num_rows, num_classes, hidden):
    L1 = num_rows - 29
    T = num_rows - 36
    H = hidden
    keys = iter(jax.random.split(key, 64))

    def rnd(shape, scale=0.1):
        return (scale * jax.random.normal(next(keys), shape)).astype(jnp.float32)

    w1p, b1, ln_g, ln_b, w2t, b2, fc1w, fc1b = [], [], [], [], [], [], [], []
    for _ in range(2):
        w1 = rnd((64, 1, 30, 3))                    # Conv2d(1, 64, (30, 3))
        w1m = w1.reshape(64, 90).T                  # (90, 64), (dr, dc) order
        w1p.append(jnp.pad(w1m, ((0, KPAD - 90), (0, 0))))       # zero-pad K -> 128
        b1.append(rnd((64,)).reshape(1, 64))
        g = rnd((64, L1, 1)) + 1.0                  # LayerNorm([64, L1, 1]) affine
        bt = rnd((64, L1, 1))
        ln_g.append(g[:, :, 0].T)                   # (L1, 64)
        ln_b.append(bt[:, :, 0].T)
        w2 = rnd((128, 64, 8, 1))                   # Conv2d(64, 128, (8, 1))
        w2t.append(jnp.transpose(w2[:, :, :, 0], (2, 1, 0)))     # (8, 64, 128)
        b2.append(rnd((128,)).reshape(1, 128))
        fw = rnd((128, T * 2 * H))                  # Linear(T*2H, 128)
        fw_nat = fw.T.reshape(T, 2 * H, 128)        # [t, :H]=fwd(t), [t, H:]=bwd(t)
        # Pre-rearrange: rows [t, H:] hold bwd weights for position T-1-t.
        fw_r = jnp.concatenate([fw_nat[:, :H, :], fw_nat[::-1, H:, :]], axis=1)
        fc1w.append(fw_r)
        fc1b.append(rnd((128,)).reshape(1, 128))

    def lstm_dir():                                 # shared nn.LSTM, one direction
        wih = rnd((4 * H, 128))
        whh = rnd((4 * H, H))
        bih = rnd((4 * H,))
        bhh = rnd((4 * H,))
        return wih.T, whh.T, (bih + bhh).reshape(1, 4 * H)

    wih_f, whh_f, bf = lstm_dir()
    wih_b, whh_b, bb = lstm_dir()
    fc2_w = rnd((num_classes, 256))                 # Linear(256, num_classes)
    fc2_b = rnd((num_classes,))

    return {
        "w1p": jnp.stack(w1p), "b1": jnp.stack(b1),
        "ln_g": jnp.stack(ln_g), "ln_b": jnp.stack(ln_b),
        "w2t": jnp.stack(w2t), "b2": jnp.stack(b2),
        "fc1w": jnp.stack(fc1w), "fc1b": jnp.stack(fc1b),
        "wih": jnp.concatenate([wih_f, wih_b], axis=1),   # (128, 8H)
        "bih": jnp.concatenate([bf, bb], axis=1),         # (1, 8H)
        "whh_f": whh_f, "whh_b": whh_b,                   # (H, 4H) each
        "fc2_w": fc2_w.T.reshape(2, 128, num_classes),
        "fc2_b": fc2_b.reshape(1, num_classes),
    }


# --------------------------------------------------------------------------
# Pure-JAX reference (mirrors the PyTorch forward; same parameter dict)
# --------------------------------------------------------------------------
def reference_forward(x, params):
    B, R, _ = x.shape
    L1 = R - 29
    T = L1 - 7
    H = params["whh_f"].shape[0]
    G = 4 * H
    p1 = build_conv1_patches(x)                                   # (2, B, L1, 128)
    outs = []
    for s in range(2):
        y1 = jnp.einsum("blk,kc->blc", p1[s], params["w1p"][s]) + params["b1"][s][None]
        y1 = _leaky(y1)
        m = jnp.mean(y1, axis=(1, 2), keepdims=True)
        v = jnp.mean(jnp.square(y1 - m), axis=(1, 2), keepdims=True)
        y1 = (y1 - m) * lax.rsqrt(v + LN_EPS) * params["ln_g"][s][None] + params["ln_b"][s][None]
        acc = jnp.zeros((B, T, 128), jnp.float32)
        for d in range(8):
            acc = acc + jnp.einsum("btc,cf->btf", y1[:, d:d + T, :], params["w2t"][s, d])
        y2 = _leaky(acc + params["b2"][s][None])                  # (B, T, 128)
        gx = jnp.einsum("btf,fg->btg", y2, params["wih"]) + params["bih"][None]

        def run_dir(gdir, whh, reverse):
            h = jnp.zeros((B, H), jnp.float32)
            c = jnp.zeros((B, H), jnp.float32)
            hs = []
            order = range(T - 1, -1, -1) if reverse else range(T)
            for t in order:
                g = gdir[:, t, :] + h @ whh
                ig = jax.nn.sigmoid(g[:, :H])
                fg = jax.nn.sigmoid(g[:, H:2 * H])
                gg = jnp.tanh(g[:, 2 * H:3 * H])
                og = jax.nn.sigmoid(g[:, 3 * H:])
                c = fg * c + ig * gg
                h = og * jnp.tanh(c)
                hs.append(h)
            if reverse:
                hs = hs[::-1]
            return jnp.stack(hs, axis=1)                          # (B, T, H)

        hf = run_dir(gx[..., :G], params["whh_f"], False)
        hb = run_dir(gx[..., G:], params["whh_b"], True)
        lstm_out = jnp.concatenate([hf, hb], axis=-1).reshape(B, T * 2 * H)
        # Undo the stored fc1 rearrangement to recover the natural Linear weight.
        fw_r = params["fc1w"][s]                                  # (T, 2H, 128)
        fw_nat = jnp.concatenate([fw_r[:, :H], fw_r[::-1, H:]], axis=1)
        w1fc = fw_nat.reshape(T * 2 * H, 128)
        outs.append(_leaky(lstm_out @ w1fc + params["fc1b"][s]))
    cat = jnp.concatenate(outs, axis=1)                           # (B, 256)
    return cat @ params["fc2_w"].reshape(256, -1) + params["fc2_b"]


# --------------------------------------------------------------------------
if __name__ == "__main__":
    B = 2
    num_rows = 40          # -> L1 = 11, T = 4
    num_columns = 6        # forward uses two 3-wide slits
    num_classes = 10
    lstm_hidden = 32       # 4H = 128: gate block exactly one lane tile

    key = jax.random.PRNGKey(0)
    kx, kp = jax.random.split(key)
    x = jax.random.normal(kx, (B, num_rows, num_columns), dtype=jnp.float32)
    params = init_params(kp, num_rows, num_classes, lstm_hidden)

    fwd = jax.jit(forward)
    out = fwd(x, params)
    out = jax.block_until_ready(out)
    assert out.shape == (B, num_classes)

    ref = reference_forward(x, params)
    np.testing.assert_allclose(np.asarray(out), np.asarray(ref), rtol=2e-2, atol=2e-2)

    print("KERNEL_OK")
</pallas_src>

<mosaic_0001>
module attributes {stable_mosaic.version = 11 : i64} {
  func.func @conv_stream_kernel(%arg0: i32, %arg1: memref<1x2x11x128xf32, #tpu.memory_space<vmem>>, %arg2: memref<1x128x64xf32, #tpu.memory_space<vmem>>, %arg3: memref<1x1x64xf32, #tpu.memory_space<vmem>>, %arg4: memref<1x11x64xf32, #tpu.memory_space<vmem>>, %arg5: memref<1x11x64xf32, #tpu.memory_space<vmem>>, %arg6: memref<1x8x64x128xf32, #tpu.memory_space<vmem>>, %arg7: memref<1x1x128xf32, #tpu.memory_space<vmem>>, %arg8: memref<128x256xf32, #tpu.memory_space<vmem>>, %arg9: memref<1x256xf32, #tpu.memory_space<vmem>>, %arg10: memref<1x2x4x256xf32, #tpu.memory_space<vmem>>) attributes {dimension_semantics = [#tpu.dimension_semantics<parallel>], iteration_bounds = array<i64: 2>, scalar_prefetch = 0 : i64, scratch_operands = 0 : i64, tpu.core_type = #tpu.core_type<tc>, window_params = [{transform_indices = @transform_0, window_bounds = array<i64: 1, 2, 11, 128>}, {transform_indices = @transform_1, window_bounds = array<i64: 1, 128, 64>}, {transform_indices = @transform_2, window_bounds = array<i64: 1, 1, 64>}, {transform_indices = @transform_3, window_bounds = array<i64: 1, 11, 64>}, {transform_indices = @transform_4, window_bounds = array<i64: 1, 11, 64>}, {transform_indices = @transform_5, window_bounds = array<i64: 1, 8, 64, 128>}, {transform_indices = @transform_6, window_bounds = array<i64: 1, 1, 128>}, {pipeline_mode = #tpu.pipeline_mode<synchronous>, transform_indices = @transform_7, window_bounds = array<i64: 128, 256>}, {pipeline_mode = #tpu.pipeline_mode<synchronous>, transform_indices = @transform_8, window_bounds = array<i64: 1, 256>}, {transform_indices = @transform_9, window_bounds = array<i64: 1, 2, 4, 256>}]} {
    %c0 = arith.constant 0 : index
    %c0_0 = arith.constant 0 : index
    %c0_1 = arith.constant 0 : index
    %0 = vector.load %arg2[%c0, %c0_0, %c0_1] : memref<1x128x64xf32, #tpu.memory_space<vmem>>, vector<1x128x64xf32>
    %1 = vector.shape_cast %0 : vector<1x128x64xf32> to vector<128x64xf32>
    %c0_2 = arith.constant 0 : index
    %c0_3 = arith.constant 0 : index
    %c0_4 = arith.constant 0 : index
    %2 = vector.load %arg3[%c0_2, %c0_3, %c0_4] : memref<1x1x64xf32, #tpu.memory_space<vmem>>, vector<1x1x64xf32>
    %3 = vector.shape_cast %2 : vector<1x1x64xf32> to vector<1x64xf32>
    %c0_5 = arith.constant 0 : index
    %c0_6 = arith.constant 0 : index
    %c0_7 = arith.constant 0 : index
    %4 = vector.load %arg4[%c0_5, %c0_6, %c0_7] : memref<1x11x64xf32, #tpu.memory_space<vmem>>, vector<1x11x64xf32>
    %5 = vector.shape_cast %4 : vector<1x11x64xf32> to vector<11x64xf32>
    %c0_8 = arith.constant 0 : index
    %c0_9 = arith.constant 0 : index
    %c0_10 = arith.constant 0 : index
    %6 = vector.load %arg5[%c0_8, %c0_9, %c0_10] : memref<1x11x64xf32, #tpu.memory_space<vmem>>, vector<1x11x64xf32>
    %7 = vector.shape_cast %6 : vector<1x11x64xf32> to vector<11x64xf32>
    %c0_11 = arith.constant 0 : index
    %c0_12 = arith.constant 0 : index
    %c0_13 = arith.constant 0 : index
    %8 = vector.load %arg7[%c0_11, %c0_12, %c0_13] : memref<1x1x128xf32, #tpu.memory_space<vmem>>, vector<1x1x128xf32>
    %9 = vector.shape_cast %8 : vector<1x1x128xf32> to vector<1x128xf32>
    %c0_14 = arith.constant 0 : index
    %c0_15 = arith.constant 0 : index
    %10 = vector.load %arg8[%c0_14, %c0_15] : memref<128x256xf32, #tpu.memory_space<vmem>>, vector<128x256xf32>
    %c0_16 = arith.constant 0 : index
    %c0_17 = arith.constant 0 : index
    %11 = vector.load %arg9[%c0_16, %c0_17] : memref<1x256xf32, #tpu.memory_space<vmem>>, vector<1x256xf32>
    %c0_18 = arith.constant 0 : index
    %c0_19 = arith.constant 0 : index
    %c0_20 = arith.constant 0 : index
    %c0_21 = arith.constant 0 : index
    %12 = vector.load %arg1[%c0_18, %c0_19, %c0_20, %c0_21] : memref<1x2x11x128xf32, #tpu.memory_space<vmem>>, vector<1x1x11x128xf32>
    %13 = vector.shape_cast %12 : vector<1x1x11x128xf32> to vector<11x128xf32>
    %cst = arith.constant dense<0.000000e+00> : vector<11x64xf32>
    %14 = tpu.matmul %13, %1, %cst {dimension_numbers = #tpu.dot_dimension_numbers<[1], [0], [0], [1], [0, 0, 1, 1], [], []>} : vector<11x128xf32>, vector<128x64xf32>, vector<11x64xf32> -> vector<11x64xf32>
    %15 = vector.broadcast %3 : vector<1x64xf32> to vector<11x64xf32>
    %16 = arith.addf %14, %15 : vector<11x64xf32>
    %cst_22 = arith.constant 0.000000e+00 : f32
    %17 = vector.broadcast %cst_22 : f32 to vector<11x64xf32>
    %18 = arith.cmpf ogt, %16, %17 : vector<11x64xf32>
    %cst_23 = arith.constant 0.00999999977 : f32
    %19 = vector.broadcast %cst_23 : f32 to vector<11x64xf32>
    %20 = arith.mulf %19, %16 : vector<11x64xf32>
    %21 = arith.select %18, %16, %20 : vector<11x64xi1>, vector<11x64xf32>
    %22 = vector.shape_cast %21 : vector<11x64xf32> to vector<1x11x64xf32>
    %cst_24 = arith.constant dense<0.000000e+00> : vector<1xf32>
    %23 = vector.multi_reduction <add>, %22, %cst_24 [1, 2] : vector<1x11x64xf32> to vector<1xf32>
    %24 = vector.shape_cast %23 : vector<1xf32> to vector<1x1x1xf32>
    %25 = vector.extract %24[0, 0, 0] : f32 from vector<1x1x1xf32>
    %cst_25 = arith.constant 7.040000e+02 : f32
    %26 = arith.divf %25, %cst_25 : f32
    %27 = vector.broadcast %26 : f32 to vector<11x64xf32>
    %28 = arith.subf %21, %27 : vector<11x64xf32>
    %29 = arith.mulf %28, %28 : vector<11x64xf32>
    %30 = vector.shape_cast %29 : vector<11x64xf32> to vector<1x11x64xf32>
    %cst_26 = arith.constant dense<0.000000e+00> : vector<1xf32>
    %31 = vector.multi_reduction <add>, %30, %cst_26 [1, 2] : vector<1x11x64xf32> to vector<1xf32>
    %32 = vector.shape_cast %31 : vector<1xf32> to vector<1x1x1xf32>
    %33 = vector.extract %32[0, 0, 0] : f32 from vector<1x1x1xf32>
    %cst_27 = arith.constant 7.040000e+02 : f32
    %34 = arith.divf %33, %cst_27 : f32
    %35 = vector.broadcast %26 : f32 to vector<11x64xf32>
    %36 = arith.subf %21, %35 : vector<11x64xf32>
    %cst_28 = arith.constant 9.99999974E-6 : f32
    %37 = arith.addf %34, %cst_28 : f32
    %38 = math.rsqrt %37 : f32
    %39 = vector.broadcast %38 : f32 to vector<11x64xf32>
    %40 = arith.mulf %36, %39 : vector<11x64xf32>
    %41 = arith.mulf %40, %5 : vector<11x64xf32>
    %42 = arith.addf %41, %7 : vector<11x64xf32>
    %cst_29 = arith.constant 0.000000e+00 : f32
    %43 = vector.broadcast %cst_29 : f32 to vector<4x128xf32>
    %44 = vector.extract_strided_slice %42 {offsets = [0, 0], sizes = [4, 64], strides = [1, 1]} : vector<11x64xf32> to vector<4x64xf32>
    %c0_30 = arith.constant 0 : index
    %c0_31 = arith.constant 0 : index
    %c0_32 = arith.constant 0 : index
    %c0_33 = arith.constant 0 : index
    %45 = vector.load %arg6[%c0_30, %c0_31, %c0_32, %c0_33] : memref<1x8x64x128xf32, #tpu.memory_space<vmem>>, vector<1x1x64x128xf32>
    %46 = vector.shape_cast %45 : vector<1x1x64x128xf32> to vector<64x128xf32>
    %cst_34 = arith.constant dense<0.000000e+00> : vector<4x128xf32>
    %47 = tpu.matmul %44, %46, %cst_34 {dimension_numbers = #tpu.dot_dimension_numbers<[1], [0], [0], [1], [0, 0, 1, 1], [], []>} : vector<4x64xf32>, vector<64x128xf32>, vector<4x128xf32> -> vector<4x128xf32>
    %48 = arith.addf %43, %47 : vector<4x128xf32>
    %49 = vector.extract_strided_slice %42 {offsets = [1, 0], sizes = [4, 64], strides = [1, 1]} : vector<11x64xf32> to vector<4x64xf32>
    %c0_35 = arith.constant 0 : index
    %c1 = arith.constant 1 : index
    %c0_36 = arith.constant 0 : index
    %c0_37 = arith.constant 0 : index
    %50 = vector.load %arg6[%c0_35, %c1, %c0_36, %c0_37] : memref<1x8x64x128xf32, #tpu.memory_space<vmem>>, vector<1x1x64x128xf32>
    %51 = vector.shape_cast %50 : vector<1x1x64x128xf32> to vector<64x128xf32>
    %cst_38 = arith.constant dense<0.000000e+00> : vector<4x128xf32>
    %52 = tpu.matmul %49, %51, %cst_38 {dimension_numbers = #tpu.dot_dimension_numbers<[1], [0], [0], [1], [0, 0, 1, 1], [], []>} : vector<4x64xf32>, vector<64x128xf32>, vector<4x128xf32> -> vector<4x128xf32>
    %53 = arith.addf %48, %52 : vector<4x128xf32>
    %54 = vector.extract_strided_slice %42 {offsets = [2, 0], sizes = [4, 64], strides = [1, 1]} : vector<11x64xf32> to vector<4x64xf32>
    %c0_39 = arith.constant 0 : index
    %c2 = arith.constant 2 : index
    %c0_40 = arith.constant 0 : index
    %c0_41 = arith.constant 0 : index
    %55 = vector.load %arg6[%c0_39, %c2, %c0_40, %c0_41] : memref<1x8x64x128xf32, #tpu.memory_space<vmem>>, vector<1x1x64x128xf32>
    %56 = vector.shape_cast %55 : vector<1x1x64x128xf32> to vector<64x128xf32>
    %cst_42 = arith.constant dense<0.000000e+00> : vector<4x128xf32>
    %57 = tpu.matmul %54, %56, %cst_42 {dimension_numbers = #tpu.dot_dimension_numbers<[1], [0], [0], [1], [0, 0, 1, 1], [], []>} : vector<4x64xf32>, vector<64x128xf32>, vector<4x128xf32> -> vector<4x128xf32>
    %58 = arith.addf %53, %57 : vector<4x128xf32>
    %59 = vector.extract_strided_slice %42 {offsets = [3, 0], sizes = [4, 64], strides = [1, 1]} : vector<11x64xf32> to vector<4x64xf32>
    %c0_43 = arith.constant 0 : index
    %c3 = arith.constant 3 : index
    %c0_44 = arith.constant 0 : index
    %c0_45 = arith.constant 0 : index
    %60 = vector.load %arg6[%c0_43, %c3, %c0_44, %c0_45] : memref<1x8x64x128xf32, #tpu.memory_space<vmem>>, vector<1x1x64x128xf32>
    %61 = vector.shape_cast %60 : vector<1x1x64x128xf32> to vector<64x128xf32>
    %cst_46 = arith.constant dense<0.000000e+00> : vector<4x128xf32>
    %62 = tpu.matmul %59, %61, %cst_46 {dimension_numbers = #tpu.dot_dimension_numbers<[1], [0], [0], [1], [0, 0, 1, 1], [], []>} : vector<4x64xf32>, vector<64x128xf32>, vector<4x128xf32> -> vector<4x128xf32>
    %63 = arith.addf %58, %62 : vector<4x128xf32>
    %64 = vector.extract_strided_slice %42 {offsets = [4, 0], sizes = [4, 64], strides = [1, 1]} : vector<11x64xf32> to vector<4x64xf32>
    %c0_47 = arith.constant 0 : index
    %c4 = arith.constant 4 : index
    %c0_48 = arith.constant 0 : index
    %c0_49 = arith.constant 0 : index
    %65 = vector.load %arg6[%c0_47, %c4, %c0_48, %c0_49] : memref<1x8x64x128xf32, #tpu.memory_space<vmem>>, vector<1x1x64x128xf32>
    %66 = vector.shape_cast %65 : vector<1x1x64x128xf32> to vector<64x128xf32>
    %cst_50 = arith.constant dense<0.000000e+00> : vector<4x128xf32>
    %67 = tpu.matmul %64, %66, %cst_50 {dimension_numbers = #tpu.dot_dimension_numbers<[1], [0], [0], [1], [0, 0, 1, 1], [], []>} : vector<4x64xf32>, vector<64x128xf32>, vector<4x128xf32> -> vector<4x128xf32>
    %68 = arith.addf %63, %67 : vector<4x128xf32>
    %69 = vector.extract_strided_slice %42 {offsets = [5, 0], sizes = [4, 64], strides = [1, 1]} : vector<11x64xf32> to vector<4x64xf32>
    %c0_51 = arith.constant 0 : index
    %c5 = arith.constant 5 : index
    %c0_52 = arith.constant 0 : index
    %c0_53 = arith.constant 0 : index
    %70 = vector.load %arg6[%c0_51, %c5, %c0_52, %c0_53] : memref<1x8x64x128xf32, #tpu.memory_space<vmem>>, vector<1x1x64x128xf32>
    %71 = vector.shape_cast %70 : vector<1x1x64x128xf32> to vector<64x128xf32>
    %cst_54 = arith.constant dense<0.000000e+00> : vector<4x128xf32>
    %72 = tpu.matmul %69, %71, %cst_54 {dimension_numbers = #tpu.dot_dimension_numbers<[1], [0], [0], [1], [0, 0, 1, 1], [], []>} : vector<4x64xf32>, vector<64x128xf32>, vector<4x128xf32> -> vector<4x128xf32>
    %73 = arith.addf %68, %72 : vector<4x128xf32>
    %74 = vector.extract_strided_slice %42 {offsets = [6, 0], sizes = [4, 64], strides = [1, 1]} : vector<11x64xf32> to vector<4x64xf32>
    %c0_55 = arith.constant 0 : index
    %c6 = arith.constant 6 : index
    %c0_56 = arith.constant 0 : index
    %c0_57 = arith.constant 0 : index
    %75 = vector.load %arg6[%c0_55, %c6, %c0_56, %c0_57] : memref<1x8x64x128xf32, #tpu.memory_space<vmem>>, vector<1x1x64x128xf32>
    %76 = vector.shape_cast %75 : vector<1x1x64x128xf32> to vector<64x128xf32>
    %cst_58 = arith.constant dense<0.000000e+00> : vector<4x128xf32>
    %77 = tpu.matmul %74, %76, %cst_58 {dimension_numbers = #tpu.dot_dimension_numbers<[1], [0], [0], [1], [0, 0, 1, 1], [], []>} : vector<4x64xf32>, vector<64x128xf32>, vector<4x128xf32> -> vector<4x128xf32>
    %78 = arith.addf %73, %77 : vector<4x128xf32>
    %79 = vector.extract_strided_slice %42 {offsets = [7, 0], sizes = [4, 64], strides = [1, 1]} : vector<11x64xf32> to vector<4x64xf32>
    %c0_59 = arith.constant 0 : index
    %c7 = arith.constant 7 : index
    %c0_60 = arith.constant 0 : index
    %c0_61 = arith.constant 0 : index
    %80 = vector.load %arg6[%c0_59, %c7, %c0_60, %c0_61] : memref<1x8x64x128xf32, #tpu.memory_space<vmem>>, vector<1x1x64x128xf32>
    %81 = vector.shape_cast %80 : vector<1x1x64x128xf32> to vector<64x128xf32>
    %cst_62 = arith.constant dense<0.000000e+00> : vector<4x128xf32>
    %82 = tpu.matmul %79, %81, %cst_62 {dimension_numbers = #tpu.dot_dimension_numbers<[1], [0], [0], [1], [0, 0, 1, 1], [], []>} : vector<4x64xf32>, vector<64x128xf32>, vector<4x128xf32> -> vector<4x128xf32>
    %83 = arith.addf %78, %82 : vector<4x128xf32>
    %84 = vector.broadcast %9 : vector<1x128xf32> to vector<4x128xf32>
    %85 = arith.addf %83, %84 : vector<4x128xf32>
    %cst_63 = arith.constant 0.000000e+00 : f32
    %86 = vector.broadcast %cst_63 : f32 to vector<4x128xf32>
    %87 = arith.cmpf ogt, %85, %86 : vector<4x128xf32>
    %cst_64 = arith.constant 0.00999999977 : f32
    %88 = vector.broadcast %cst_64 : f32 to vector<4x128xf32>
    %89 = arith.mulf %88, %85 : vector<4x128xf32>
    %90 = arith.select %87, %85, %89 : vector<4x128xi1>, vector<4x128xf32>
    %cst_65 = arith.constant dense<0.000000e+00> : vector<4x256xf32>
    %91 = tpu.matmul %90, %10, %cst_65 {dimension_numbers = #tpu.dot_dimension_numbers<[1], [0], [0], [1], [0, 0, 1, 1], [], []>} : vector<4x128xf32>, vector<128x256xf32>, vector<4x256xf32> -> vector<4x256xf32>
    %92 = vector.broadcast %11 : vector<1x256xf32> to vector<4x256xf32>
    %93 = arith.addf %91, %92 : vector<4x256xf32>
    %c0_66 = arith.constant 0 : index
    %c0_67 = arith.constant 0 : index
    %c0_68 = arith.constant 0 : index
    %c0_69 = arith.constant 0 : index
    %94 = vector.load %arg10[%c0_66, %c0_67, %c0_68, %c0_69] : memref<1x2x4x256xf32, #tpu.memory_space<vmem>>, vector<1x1x4x256xf32>
    %95 = vector.shape_cast %94 : vector<1x1x4x256xf32> to vector<4x256xf32>
    %96 = vector.shape_cast %93 : vector<4x256xf32> to vector<1x1x4x256xf32>
    tpu.vector_store %arg10[%c0_66, %c0_67, %c0_68, %c0_69], %96 {strides = array<i32>} : memref<1x2x4x256xf32, #tpu.memory_space<vmem>>, vector<1x1x4x256xf32>,
    %c0_70 = arith.constant 0 : index
    %c1_71 = arith.constant 1 : index
    %c0_72 = arith.constant 0 : index
    %c0_73 = arith.constant 0 : index
    %97 = vector.load %arg1[%c0_70, %c1_71, %c0_72, %c0_73] : memref<1x2x11x128xf32, #tpu.memory_space<vmem>>, vector<1x1x11x128xf32>
    %98 = vector.shape_cast %97 : vector<1x1x11x128xf32> to vector<11x128xf32>
    %cst_74 = arith.constant dense<0.000000e+00> : vector<11x64xf32>
    %99 = tpu.matmul %98, %1, %cst_74 {dimension_numbers = #tpu.dot_dimension_numbers<[1], [0], [0], [1], [0, 0, 1, 1], [], []>} : vector<11x128xf32>, vector<128x64xf32>, vector<11x64xf32> -> vector<11x64xf32>
    %100 = vector.broadcast %3 : vector<1x64xf32> to vector<11x64xf32>
    %101 = arith.addf %99, %100 : vector<11x64xf32>
    %cst_75 = arith.constant 0.000000e+00 : f32
    %102 = vector.broadcast %cst_75 : f32 to vector<11x64xf32>
    %103 = arith.cmpf ogt, %101, %102 : vector<11x64xf32>
    %cst_76 = arith.constant 0.00999999977 : f32
    %104 = vector.broadcast %cst_76 : f32 to vector<11x64xf32>
    %105 = arith.mulf %104, %101 : vector<11x64xf32>
    %106 = arith.select %103, %101, %105 : vector<11x64xi1>, vector<11x64xf32>
    %107 = vector.shape_cast %106 : vector<11x64xf32> to vector<1x11x64xf32>
    %cst_77 = arith.constant dense<0.000000e+00> : vector<1xf32>
    %108 = vector.multi_reduction <add>, %107, %cst_77 [1, 2] : vector<1x11x64xf32> to vector<1xf32>
    %109 = vector.shape_cast %108 : vector<1xf32> to vector<1x1x1xf32>
    %110 = vector.extract %109[0, 0, 0] : f32 from vector<1x1x1xf32>
    %cst_78 = arith.constant 7.040000e+02 : f32
    %111 = arith.divf %110, %cst_78 : f32
    %112 = vector.broadcast %111 : f32 to vector<11x64xf32>
    %113 = arith.subf %106, %112 : vector<11x64xf32>
    %114 = arith.mulf %113, %113 : vector<11x64xf32>
    %115 = vector.shape_cast %114 : vector<11x64xf32> to vector<1x11x64xf32>
    %cst_79 = arith.constant dense<0.000000e+00> : vector<1xf32>
    %116 = vector.multi_reduction <add>, %115, %cst_79 [1, 2] : vector<1x11x64xf32> to vector<1xf32>
    %117 = vector.shape_cast %116 : vector<1xf32> to vector<1x1x1xf32>
    %118 = vector.extract %117[0, 0, 0] : f32 from vector<1x1x1xf32>
    %cst_80 = arith.constant 7.040000e+02 : f32
    %119 = arith.divf %118, %cst_80 : f32
    %120 = vector.broadcast %111 : f32 to vector<11x64xf32>
    %121 = arith.subf %106, %120 : vector<11x64xf32>
    %cst_81 = arith.constant 9.99999974E-6 : f32
    %122 = arith.addf %119, %cst_81 : f32
    %123 = math.rsqrt %122 : f32
    %124 = vector.broadcast %123 : f32 to vector<11x64xf32>
    %125 = arith.mulf %121, %124 : vector<11x64xf32>
    %126 = arith.mulf %125, %5 : vector<11x64xf32>
    %127 = arith.addf %126, %7 : vector<11x64xf32>
    %cst_82 = arith.constant 0.000000e+00 : f32
    %128 = vector.broadcast %cst_82 : f32 to vector<4x128xf32>
    %129 = vector.extract_strided_slice %127 {offsets = [0, 0], sizes = [4, 64], strides = [1, 1]} : vector<11x64xf32> to vector<4x64xf32>
    %c0_83 = arith.constant 0 : index
    %c0_84 = arith.constant 0 : index
    %c0_85 = arith.constant 0 : index
    %c0_86 = arith.constant 0 : index
    %130 = vector.load %arg6[%c0_83, %c0_84, %c0_85, %c0_86] : memref<1x8x64x128xf32, #tpu.memory_space<vmem>>, vector<1x1x64x128xf32>
    %131 = vector.shape_cast %130 : vector<1x1x64x128xf32> to vector<64x128xf32>
    %cst_87 = arith.constant dense<0.000000e+00> : vector<4x128xf32>
    %132 = tpu.matmul %129, %131, %cst_87 {dimension_numbers = #tpu.dot_dimension_numbers<[1], [0], [0], [1], [0, 0, 1, 1], [], []>} : vector<4x64xf32>, vector<64x128xf32>, vector<4x128xf32> -> vector<4x128xf32>
    %133 = arith.addf %128, %132 : vector<4x128xf32>
    %134 = vector.extract_strided_slice %127 {offsets = [1, 0], sizes = [4, 64], strides = [1, 1]} : vector<11x64xf32> to vector<4x64xf32>
    %c0_88 = arith.constant 0 : index
    %c1_89 = arith.constant 1 : index
    %c0_90 = arith.constant 0 : index
    %c0_91 = arith.constant 0 : index
    %135 = vector.load %arg6[%c0_88, %c1_89, %c0_90, %c0_91] : memref<1x8x64x128xf32, #tpu.memory_space<vmem>>, vector<1x1x64x128xf32>
    %136 = vector.shape_cast %135 : vector<1x1x64x128xf32> to vector<64x128xf32>
    %cst_92 = arith.constant dense<0.000000e+00> : vector<4x128xf32>
    %137 = tpu.matmul %134, %136, %cst_92 {dimension_numbers = #tpu.dot_dimension_numbers<[1], [0], [0], [1], [0, 0, 1, 1], [], []>} : vector<4x64xf32>, vector<64x128xf32>, vector<4x128xf32> -> vector<4x128xf32>
    %138 = arith.addf %133, %137 : vector<4x128xf32>
    %139 = vector.extract_strided_slice %127 {offsets = [2, 0], sizes = [4, 64], strides = [1, 1]} : vector<11x64xf32> to vector<4x64xf32>
    %c0_93 = arith.constant 0 : index
    %c2_94 = arith.constant 2 : index
    %c0_95 = arith.constant 0 : index
    %c0_96 = arith.constant 0 : index
    %140 = vector.load %arg6[%c0_93, %c2_94, %c0_95, %c0_96] : memref<1x8x64x128xf32, #tpu.memory_space<vmem>>, vector<1x1x64x128xf32>
    %141 = vector.shape_cast %140 : vector<1x1x64x128xf32> to vector<64x128xf32>
    %cst_97 = arith.constant dense<0.000000e+00> : vector<4x128xf32>
    %142 = tpu.matmul %139, %141, %cst_97 {dimension_numbers = #tpu.dot_dimension_numbers<[1], [0], [0], [1], [0, 0, 1, 1], [], []>} : vector<4x64xf32>, vector<64x128xf32>, vector<4x128xf32> -> vector<4x128xf32>
    %143 = arith.addf %138, %142 : vector<4x128xf32>
    %144 = vector.extract_strided_slice %127 {offsets = [3, 0], sizes = [4, 64], strides = [1, 1]} : vector<11x64xf32> to vector<4x64xf32>
    %c0_98 = arith.constant 0 : index
    %c3_99 = arith.constant 3 : index
    %c0_100 = arith.constant 0 : index
    %c0_101 = arith.constant 0 : index
    %145 = vector.load %arg6[%c0_98, %c3_99, %c0_100, %c0_101] : memref<1x8x64x128xf32, #tpu.memory_space<vmem>>, vector<1x1x64x128xf32>
    %146 = vector.shape_cast %145 : vector<1x1x64x128xf32> to vector<64x128xf32>
    %cst_102 = arith.constant dense<0.000000e+00> : vector<4x128xf32>
    %147 = tpu.matmul %144, %146, %cst_102 {dimension_numbers = #tpu.dot_dimension_numbers<[1], [0], [0], [1], [0, 0, 1, 1], [], []>} : vector<4x64xf32>, vector<64x128xf32>, vector<4x128xf32> -> vector<4x128xf32>
    %148 = arith.addf %143, %147 : vector<4x128xf32>
    %149 = vector.extract_strided_slice %127 {offsets = [4, 0], sizes = [4, 64], strides = [1, 1]} : vector<11x64xf32> to vector<4x64xf32>
    %c0_103 = arith.constant 0 : index
    %c4_104 = arith.constant 4 : index
    %c0_105 = arith.constant 0 : index
    %c0_106 = arith.constant 0 : index
    %150 = vector.load %arg6[%c0_103, %c4_104, %c0_105, %c0_106] : memref<1x8x64x128xf32, #tpu.memory_space<vmem>>, vector<1x1x64x128xf32>
    %151 = vector.shape_cast %150 : vector<1x1x64x128xf32> to vector<64x128xf32>
    %cst_107 = arith.constant dense<0.000000e+00> : vector<4x128xf32>
    %152 = tpu.matmul %149, %151, %cst_107 {dimension_numbers = #tpu.dot_dimension_numbers<[1], [0], [0], [1], [0, 0, 1, 1], [], []>} : vector<4x64xf32>, vector<64x128xf32>, vector<4x128xf32> -> vector<4x128xf32>
    %153 = arith.addf %148, %152 : vector<4x128xf32>
    %154 = vector.extract_strided_slice %127 {offsets = [5, 0], sizes = [4, 64], strides = [1, 1]} : vector<11x64xf32> to vector<4x64xf32>
    %c0_108 = arith.constant 0 : index
    %c5_109 = arith.constant 5 : index
    %c0_110 = arith.constant 0 : index
    %c0_111 = arith.constant 0 : index
    %155 = vector.load %arg6[%c0_108, %c5_109, %c0_110, %c0_111] : memref<1x8x64x128xf32, #tpu.memory_space<vmem>>, vector<1x1x64x128xf32>
    %156 = vector.shape_cast %155 : vector<1x1x64x128xf32> to vector<64x128xf32>
    %cst_112 = arith.constant dense<0.000000e+00> : vector<4x128xf32>
    %157 = tpu.matmul %154, %156, %cst_112 {dimension_numbers = #tpu.dot_dimension_numbers<[1], [0], [0], [1], [0, 0, 1, 1], [], []>} : vector<4x64xf32>, vector<64x128xf32>, vector<4x128xf32> -> vector<4x128xf32>
    %158 = arith.addf %153, %157 : vector<4x128xf32>
    %159 = vector.extract_strided_slice %127 {offsets = [6, 0], sizes = [4, 64], strides = [1, 1]} : vector<11x64xf32> to vector<4x64xf32>
    %c0_113 = arith.constant 0 : index
    %c6_114 = arith.constant 6 : index
    %c0_115 = arith.constant 0 : index
    %c0_116 = arith.constant 0 : index
    %160 = vector.load %arg6[%c0_113, %c6_114, %c0_115, %c0_116] : memref<1x8x64x128xf32, #tpu.memory_space<vmem>>, vector<1x1x64x128xf32>
    %161 = vector.shape_cast %160 : vector<1x1x64x128xf32> to vector<64x128xf32>
    %cst_117 = arith.constant dense<0.000000e+00> : vector<4x128xf32>
    %162 = tpu.matmul %159, %161, %cst_117 {dimension_numbers = #tpu.dot_dimension_numbers<[1], [0], [0], [1], [0, 0, 1, 1], [], []>} : vector<4x64xf32>, vector<64x128xf32>, vector<4x128xf32> -> vector<4x128xf32>
    %163 = arith.addf %158, %162 : vector<4x128xf32>
    %164 = vector.extract_strided_slice %127 {offsets = [7, 0], sizes = [4, 64], strides = [1, 1]} : vector<11x64xf32> to vector<4x64xf32>
    %c0_118 = arith.constant 0 : index
    %c7_119 = arith.constant 7 : index
    %c0_120 = arith.constant 0 : index
    %c0_121 = arith.constant 0 : index
    %165 = vector.load %arg6[%c0_118, %c7_119, %c0_120, %c0_121] : memref<1x8x64x128xf32, #tpu.memory_space<vmem>>, vector<1x1x64x128xf32>
    %166 = vector.shape_cast %165 : vector<1x1x64x128xf32> to vector<64x128xf32>
    %cst_122 = arith.constant dense<0.000000e+00> : vector<4x128xf32>
    %167 = tpu.matmul %164, %166, %cst_122 {dimension_numbers = #tpu.dot_dimension_numbers<[1], [0], [0], [1], [0, 0, 1, 1], [], []>} : vector<4x64xf32>, vector<64x128xf32>, vector<4x128xf32> -> vector<4x128xf32>
    %168 = arith.addf %163, %167 : vector<4x128xf32>
    %169 = vector.broadcast %9 : vector<1x128xf32> to vector<4x128xf32>
    %170 = arith.addf %168, %169 : vector<4x128xf32>
    %cst_123 = arith.constant 0.000000e+00 : f32
    %171 = vector.broadcast %cst_123 : f32 to vector<4x128xf32>
    %172 = arith.cmpf ogt, %170, %171 : vector<4x128xf32>
    %cst_124 = arith.constant 0.00999999977 : f32
    %173 = vector.broadcast %cst_124 : f32 to vector<4x128xf32>
    %174 = arith.mulf %173, %170 : vector<4x128xf32>
    %175 = arith.select %172, %170, %174 : vector<4x128xi1>, vector<4x128xf32>
    %cst_125 = arith.constant dense<0.000000e+00> : vector<4x256xf32>
    %176 = tpu.matmul %175, %10, %cst_125 {dimension_numbers = #tpu.dot_dimension_numbers<[1], [0], [0], [1], [0, 0, 1, 1], [], []>} : vector<4x128xf32>, vector<128x256xf32>, vector<4x256xf32> -> vector<4x256xf32>
    %177 = vector.broadcast %11 : vector<1x256xf32> to vector<4x256xf32>
    %178 = arith.addf %176, %177 : vector<4x256xf32>
    %c0_126 = arith.constant 0 : index
    %c1_127 = arith.constant 1 : index
    %c0_128 = arith.constant 0 : index
    %c0_129 = arith.constant 0 : index
    %179 = vector.load %arg10[%c0_126, %c1_127, %c0_128, %c0_129] : memref<1x2x4x256xf32, #tpu.memory_space<vmem>>, vector<1x1x4x256xf32>
    %180 = vector.shape_cast %179 : vector<1x1x4x256xf32> to vector<4x256xf32>
    %181 = vector.shape_cast %178 : vector<4x256xf32> to vector<1x1x4x256xf32>
    tpu.vector_store %arg10[%c0_126, %c1_127, %c0_128, %c0_129], %181 {strides = array<i32>} : memref<1x2x4x256xf32, #tpu.memory_space<vmem>>, vector<1x1x4x256xf32>,
    return
  }
  func.func @transform_0(%arg0: i32) -> (i32, i32, i32, i32) {
    %c0_i32 = arith.constant 0 : i32
    %c0_i32_0 = arith.constant 0 : i32
    %c0_i32_1 = arith.constant 0 : i32
    %c0_i32_2 = arith.constant 0 : i32
    return %arg0, %c0_i32, %c0_i32_0, %c0_i32_1 : i32, i32, i32, i32
  }
  func.func @transform_1(%arg0: i32) -> (i32, i32, i32) {
    %c0_i32 = arith.constant 0 : i32
    %c0_i32_0 = arith.constant 0 : i32
    %c0_i32_1 = arith.constant 0 : i32
    return %arg0, %c0_i32, %c0_i32_0 : i32, i32, i32
  }
  func.func @transform_2(%arg0: i32) -> (i32, i32, i32) {
    %c0_i32 = arith.constant 0 : i32
    %c0_i32_0 = arith.constant 0 : i32
    %c0_i32_1 = arith.constant 0 : i32
    return %arg0, %c0_i32, %c0_i32_0 : i32, i32, i32
  }
  func.func @transform_3(%arg0: i32) -> (i32, i32, i32) {
    %c0_i32 = arith.constant 0 : i32
    %c0_i32_0 = arith.constant 0 : i32
    %c0_i32_1 = arith.constant 0 : i32
    return %arg0, %c0_i32, %c0_i32_0 : i32, i32, i32
  }
  func.func @transform_4(%arg0: i32) -> (i32, i32, i32) {
    %c0_i32 = arith.constant 0 : i32
    %c0_i32_0 = arith.constant 0 : i32
    %c0_i32_1 = arith.constant 0 : i32
    return %arg0, %c0_i32, %c0_i32_0 : i32, i32, i32
  }
  func.func @transform_5(%arg0: i32) -> (i32, i32, i32, i32) {
    %c0_i32 = arith.constant 0 : i32
    %c0_i32_0 = arith.constant 0 : i32
    %c0_i32_1 = arith.constant 0 : i32
    %c0_i32_2 = arith.constant 0 : i32
    return %arg0, %c0_i32, %c0_i32_0, %c0_i32_1 : i32, i32, i32, i32
  }
  func.func @transform_6(%arg0: i32) -> (i32, i32, i32) {
    %c0_i32 = arith.constant 0 : i32
    %c0_i32_0 = arith.constant 0 : i32
    %c0_i32_1 = arith.constant 0 : i32
    return %arg0, %c0_i32, %c0_i32_0 : i32, i32, i32
  }
  func.func @transform_7(%arg0: i32) -> (i32, i32) {
    %c0_i32 = arith.constant 0 : i32
    %c0_i32_0 = arith.constant 0 : i32
    %c0_i32_1 = arith.constant 0 : i32
    return %c0_i32, %c0_i32_0 : i32, i32
  }
  func.func @transform_8(%arg0: i32) -> (i32, i32) {
    %c0_i32 = arith.constant 0 : i32
    %c0_i32_0 = arith.constant 0 : i32
    %c0_i32_1 = arith.constant 0 : i32
    return %c0_i32, %c0_i32_0 : i32, i32
  }
  func.func @transform_9(%arg0: i32) -> (i32, i32, i32, i32) {
    %c0_i32 = arith.constant 0 : i32
    %c0_i32_0 = arith.constant 0 : i32
    %c0_i32_1 = arith.constant 0 : i32
    %c0_i32_2 = arith.constant 0 : i32
    return %arg0, %c0_i32, %c0_i32_0, %c0_i32_1 : i32, i32, i32, i32
  }
}

module attributes {stable_mosaic.version = 11 : i64} {
  func.func @bilstm_fc1_kernel(%arg0: i32, %arg1: memref<1x4x2x256xf32, #tpu.memory_space<vmem>>, %arg2: memref<32x128xf32, #tpu.memory_space<vmem>>, %arg3: memref<32x128xf32, #tpu.memory_space<vmem>>, %arg4: memref<1x4x64x128xf32, #tpu.memory_space<vmem>>, %arg5: memref<1x1x128xf32, #tpu.memory_space<vmem>>, %arg6: memref<1x2x128xf32, #tpu.memory_space<vmem>>) attributes {dimension_semantics = [#tpu.dimension_semantics<parallel>], iteration_bounds = array<i64: 2>, scalar_prefetch = 0 : i64, scratch_operands = 0 : i64, tpu.core_type = #tpu.core_type<tc>, window_params = [{transform_indices = @transform_0, window_bounds = array<i64: 1, 4, 2, 256>}, {pipeline_mode = #tpu.pipeline_mode<synchronous>, transform_indices = @transform_1, window_bounds = array<i64: 32, 128>}, {pipeline_mode = #tpu.pipeline_mode<synchronous>, transform_indices = @transform_2, window_bounds = array<i64: 32, 128>}, {transform_indices = @transform_3, window_bounds = array<i64: 1, 4, 64, 128>}, {transform_indices = @transform_4, window_bounds = array<i64: 1, 1, 128>}, {transform_indices = @transform_5, window_bounds = array<i64: 1, 2, 128>}]} {
    %c0 = arith.constant 0 : index
    %c0_0 = arith.constant 0 : index
    %0 = vector.load %arg2[%c0, %c0_0] : memref<32x128xf32, #tpu.memory_space<vmem>>, vector<32x128xf32>
    %c0_1 = arith.constant 0 : index
    %c0_2 = arith.constant 0 : index
    %1 = vector.load %arg3[%c0_1, %c0_2] : memref<32x128xf32, #tpu.memory_space<vmem>>, vector<32x128xf32>
    %cst = arith.constant 0.000000e+00 : f32
    %2 = vector.broadcast %cst : f32 to vector<2x32xf32>
    %cst_3 = arith.constant 0.000000e+00 : f32
    %3 = vector.broadcast %cst_3 : f32 to vector<2x128xf32>
    %c0_i32 = arith.constant 0 : i32
    %c4_i32 = arith.constant 4 : i32
    %4 = arith.addi %c0_i32, %c4_i32 : i32
    %c1_i32 = arith.constant 1 : i32
    %5:5 = scf.for %arg7 = %c0_i32 to %4 step %c1_i32 iter_args(%arg8 = %2, %arg9 = %2, %arg10 = %2, %arg11 = %2, %arg12 = %3) -> (vector<2x32xf32>, vector<2x32xf32>, vector<2x32xf32>, vector<2x32xf32>, vector<2x128xf32>)  : i32 {
      %c0_13 = arith.constant 0 : index
      %18 = arith.index_cast %arg7 : i32 to index
      %c0_14 = arith.constant 0 : index
      %c0_15 = arith.constant 0 : index
      %19 = vector.load %arg1[%c0_13, %18, %c0_14, %c0_15] : memref<1x4x2x256xf32, #tpu.memory_space<vmem>>, vector<1x1x2x256xf32>
      %20 = vector.shape_cast %19 : vector<1x1x2x256xf32> to vector<2x256xf32>
      %21 = vector.extract_strided_slice %20 {offsets = [0, 0], sizes = [2, 128], strides = [1, 1]} : vector<2x256xf32> to vector<2x128xf32>
      %cst_16 = arith.constant dense<0.000000e+00> : vector<2x128xf32>
      %22 = tpu.matmul %arg8, %0, %cst_16 {dimension_numbers = #tpu.dot_dimension_numbers<[1], [0], [0], [1], [0, 0, 1, 1], [], []>} : vector<2x32xf32>, vector<32x128xf32>, vector<2x128xf32> -> vector<2x128xf32>
      %23 = arith.addf %21, %22 : vector<2x128xf32>
      %24 = vector.extract_strided_slice %20 {offsets = [0, 128], sizes = [2, 128], strides = [1, 1]} : vector<2x256xf32> to vector<2x128xf32>
      %cst_17 = arith.constant dense<0.000000e+00> : vector<2x128xf32>
      %25 = tpu.matmul %arg10, %1, %cst_17 {dimension_numbers = #tpu.dot_dimension_numbers<[1], [0], [0], [1], [0, 0, 1, 1], [], []>} : vector<2x32xf32>, vector<32x128xf32>, vector<2x128xf32> -> vector<2x128xf32>
      %26 = arith.addf %24, %25 : vector<2x128xf32>
      %27 = vector.extract_strided_slice %23 {offsets = [0, 0], sizes = [2, 32], strides = [1, 1]} : vector<2x128xf32> to vector<2x32xf32>
      %28 = arith.negf %27 : vector<2x32xf32>
      %29 = math.exp %28 : vector<2x32xf32>
      %cst_18 = arith.constant 1.000000e+00 : f32
      %30 = vector.broadcast %cst_18 : f32 to vector<2x32xf32>
      %31 = arith.addf %30, %29 : vector<2x32xf32>
      %32 = arith.divf %30, %31 : vector<2x32xf32>
      %33 = vector.extract_strided_slice %23 {offsets = [0, 32], sizes = [2, 32], strides = [1, 1]} : vector<2x128xf32> to vector<2x32xf32>
      %34 = arith.negf %33 : vector<2x32xf32>
      %35 = math.exp %34 : vector<2x32xf32>
      %cst_19 = arith.constant 1.000000e+00 : f32
      %36 = vector.broadcast %cst_19 : f32 to vector<2x32xf32>
      %37 = arith.addf %36, %35 : vector<2x32xf32>
      %38 = arith.divf %36, %37 : vector<2x32xf32>
      %39 = vector.extract_strided_slice %23 {offsets = [0, 64], sizes = [2, 32], strides = [1, 1]} : vector<2x128xf32> to vector<2x32xf32>
      %40 = math.tanh %39 : vector<2x32xf32>
      %41 = vector.extract_strided_slice %23 {offsets = [0, 96], sizes = [2, 32], strides = [1, 1]} : vector<2x128xf32> to vector<2x32xf32>
      %42 = arith.negf %41 : vector<2x32xf32>
      %43 = math.exp %42 : vector<2x32xf32>
      %cst_20 = arith.constant 1.000000e+00 : f32
      %44 = vector.broadcast %cst_20 : f32 to vector<2x32xf32>
      %45 = arith.addf %44, %43 : vector<2x32xf32>
      %46 = arith.divf %44, %45 : vector<2x32xf32>
      %47 = arith.mulf %38, %arg9 : vector<2x32xf32>
      %48 = arith.mulf %32, %40 : vector<2x32xf32>
      %49 = arith.addf %47, %48 : vector<2x32xf32>
      %50 = math.tanh %49 : vector<2x32xf32>
      %51 = arith.mulf %46, %50 : vector<2x32xf32>
      %52 = vector.extract_strided_slice %26 {offsets = [0, 0], sizes = [2, 32], strides = [1, 1]} : vector<2x128xf32> to vector<2x32xf32>
      %53 = arith.negf %52 : vector<2x32xf32>
      %54 = math.exp %53 : vector<2x32xf32>
      %cst_21 = arith.constant 1.000000e+00 : f32
      %55 = vector.broadcast %cst_21 : f32 to vector<2x32xf32>
      %56 = arith.addf %55, %54 : vector<2x32xf32>
      %57 = arith.divf %55, %56 : vector<2x32xf32>
      %58 = vector.extract_strided_slice %26 {offsets = [0, 32], sizes = [2, 32], strides = [1, 1]} : vector<2x128xf32> to vector<2x32xf32>
      %59 = arith.negf %58 : vector<2x32xf32>
      %60 = math.exp %59 : vector<2x32xf32>
      %cst_22 = arith.constant 1.000000e+00 : f32
      %61 = vector.broadcast %cst_22 : f32 to vector<2x32xf32>
      %62 = arith.addf %61, %60 : vector<2x32xf32>
      %63 = arith.divf %61, %62 : vector<2x32xf32>
      %64 = vector.extract_strided_slice %26 {offsets = [0, 64], sizes = [2, 32], strides = [1, 1]} : vector<2x128xf32> to vector<2x32xf32>
      %65 = math.tanh %64 : vector<2x32xf32>
      %66 = vector.extract_strided_slice %26 {offsets = [0, 96], sizes = [2, 32], strides = [1, 1]} : vector<2x128xf32> to vector<2x32xf32>
      %67 = arith.negf %66 : vector<2x32xf32>
      %68 = math.exp %67 : vector<2x32xf32>
      %cst_23 = arith.constant 1.000000e+00 : f32
      %69 = vector.broadcast %cst_23 : f32 to vector<2x32xf32>
      %70 = arith.addf %69, %68 : vector<2x32xf32>
      %71 = arith.divf %69, %70 : vector<2x32xf32>
      %72 = arith.mulf %63, %arg11 : vector<2x32xf32>
      %73 = arith.mulf %57, %65 : vector<2x32xf32>
      %74 = arith.addf %72, %73 : vector<2x32xf32>
      %75 = math.tanh %74 : vector<2x32xf32>
      %76 = arith.mulf %71, %75 : vector<2x32xf32>
      %c0_24 = arith.constant 0 : index
      %77 = arith.index_cast %arg7 : i32 to index
      %c0_25 = arith.constant 0 : index
      %c0_26 = arith.constant 0 : index
      %78 = vector.load %arg4[%c0_24, %77, %c0_25, %c0_26] : memref<1x4x64x128xf32, #tpu.memory_space<vmem>>, vector<1x1x64x128xf32>
      %79 = vector.shape_cast %78 : vector<1x1x64x128xf32> to vector<64x128xf32>
      %80 = vector.extract_strided_slice %79 {offsets = [0, 0], sizes = [32, 128], strides = [1, 1]} : vector<64x128xf32> to vector<32x128xf32>
      %cst_27 = arith.constant dense<0.000000e+00> : vector<2x128xf32>
      %81 = tpu.matmul %51, %80, %cst_27 {dimension_numbers = #tpu.dot_dimension_numbers<[1], [0], [0], [1], [0, 0, 1, 1], [], []>} : vector<2x32xf32>, vector<32x128xf32>, vector<2x128xf32> -> vector<2x128xf32>
      %82 = arith.addf %arg12, %81 : vector<2x128xf32>
      %83 = vector.extract_strided_slice %79 {offsets = [32, 0], sizes = [32, 128], strides = [1, 1]} : vector<64x128xf32> to vector<32x128xf32>
      %cst_28 = arith.constant dense<0.000000e+00> : vector<2x128xf32>
      %84 = tpu.matmul %76, %83, %cst_28 {dimension_numbers = #tpu.dot_dimension_numbers<[1], [0], [0], [1], [0, 0, 1, 1], [], []>} : vector<2x32xf32>, vector<32x128xf32>, vector<2x128xf32> -> vector<2x128xf32>
      %85 = arith.addf %82, %84 : vector<2x128xf32>
      scf.yield %51, %49, %76, %74, %85 : vector<2x32xf32>, vector<2x32xf32>, vector<2x32xf32>, vector<2x32xf32>, vector<2x128xf32>
    }
    %c4_i32_4 = arith.constant 4 : i32
    %c0_5 = arith.constant 0 : index
    %c0_6 = arith.constant 0 : index
    %c0_7 = arith.constant 0 : index
    %6 = vector.load %arg5[%c0_5, %c0_6, %c0_7] : memref<1x1x128xf32, #tpu.memory_space<vmem>>, vector<1x1x128xf32>
    %7 = vector.shape_cast %6 : vector<1x1x128xf32> to vector<1x128xf32>
    %8 = vector.broadcast %7 : vector<1x128xf32> to vector<2x128xf32>
    %9 = arith.addf %5#4, %8 : vector<2x128xf32>
    %cst_8 = arith.constant 0.000000e+00 : f32
    %10 = vector.broadcast %cst_8 : f32 to vector<2x128xf32>
    %11 = arith.cmpf ogt, %9, %10 : vector<2x128xf32>
    %cst_9 = arith.constant 0.00999999977 : f32
    %12 = vector.broadcast %cst_9 : f32 to vector<2x128xf32>
    %13 = arith.mulf %12, %9 : vector<2x128xf32>
    %14 = arith.select %11, %9, %13 : vector<2x128xi1>, vector<2x128xf32>
    %c0_10 = arith.constant 0 : index
    %c0_11 = arith.constant 0 : index
    %c0_12 = arith.constant 0 : index
    %15 = vector.load %arg6[%c0_10, %c0_11, %c0_12] : memref<1x2x128xf32, #tpu.memory_space<vmem>>, vector<1x2x128xf32>
    %16 = vector.shape_cast %15 : vector<1x2x128xf32> to vector<2x128xf32>
    %17 = vector.shape_cast %14 : vector<2x128xf32> to vector<1x2x128xf32>
    tpu.vector_store %arg6[%c0_10, %c0_11, %c0_12], %17 {strides = array<i32>} : memref<1x2x128xf32, #tpu.memory_space<vmem>>, vector<1x2x128xf32>,
    return
  }
  func.func @transform_0(%arg0: i32) -> (i32, i32, i32, i32) {
    %c0_i32 = arith.constant 0 : i32
    %c0_i32_0 = arith.constant 0 : i32
    %c0_i32_1 = arith.constant 0 : i32
    %c0_i32_2 = arith.constant 0 : i32
    return %arg0, %c0_i32, %c0_i32_0, %c0_i32_1 : i32, i32, i32, i32
  }
  func.func @transform_1(%arg0: i32) -> (i32, i32) {
    %c0_i32 = arith.constant 0 : i32
    %c0_i32_0 = arith.constant 0 : i32
    %c0_i32_1 = arith.constant 0 : i32
    return %c0_i32, %c0_i32_0 : i32, i32
  }
  func.func @transform_2(%arg0: i32) -> (i32, i32) {
    %c0_i32 = arith.constant 0 : i32
    %c0_i32_0 = arith.constant 0 : i32
    %c0_i32_1 = arith.constant 0 : i32
    return %c0_i32, %c0_i32_0 : i32, i32
  }
  func.func @transform_3(%arg0: i32) -> (i32, i32, i32, i32) {
    %c0_i32 = arith.constant 0 : i32
    %c0_i32_0 = arith.constant 0 : i32
    %c0_i32_1 = arith.constant 0 : i32
    %c0_i32_2 = arith.constant 0 : i32
    return %arg0, %c0_i32, %c0_i32_0, %c0_i32_1 : i32, i32, i32, i32
  }
  func.func @transform_4(%arg0: i32) -> (i32, i32, i32) {
    %c0_i32 = arith.constant 0 : i32
    %c0_i32_0 = arith.constant 0 : i32
    %c0_i32_1 = arith.constant 0 : i32
    return %arg0, %c0_i32, %c0_i32_0 : i32, i32, i32
  }
  func.func @transform_5(%arg0: i32) -> (i32, i32, i32) {
    %c0_i32 = arith.constant 0 : i32
    %c0_i32_0 = arith.constant 0 : i32
    %c0_i32_1 = arith.constant 0 : i32
    return %arg0, %c0_i32, %c0_i32_0 : i32, i32, i32
  }
}

module attributes {stable_mosaic.version = 11 : i64} {
  func.func @fc2_kernel(%arg0: memref<2x2x128xf32, #tpu.memory_space<vmem>>, %arg1: memref<2x128x10xf32, #tpu.memory_space<vmem>>, %arg2: memref<1x10xf32, #tpu.memory_space<vmem>>, %arg3: memref<2x10xf32, #tpu.memory_space<vmem>>) attributes {dimension_semantics = [], scalar_prefetch = 0 : i64, scratch_operands = 0 : i64, tpu.core_type = #tpu.core_type<tc>} {
    %c0 = arith.constant 0 : index
    %c0_0 = arith.constant 0 : index
    %c0_1 = arith.constant 0 : index
    %0 = vector.load %arg0[%c0, %c0_0, %c0_1] : memref<2x2x128xf32, #tpu.memory_space<vmem>>, vector<1x2x128xf32>
    %1 = vector.shape_cast %0 : vector<1x2x128xf32> to vector<2x128xf32>
    %c0_2 = arith.constant 0 : index
    %c0_3 = arith.constant 0 : index
    %c0_4 = arith.constant 0 : index
    %2 = vector.load %arg1[%c0_2, %c0_3, %c0_4] : memref<2x128x10xf32, #tpu.memory_space<vmem>>, vector<1x128x10xf32>
    %3 = vector.shape_cast %2 : vector<1x128x10xf32> to vector<128x10xf32>
    %cst = arith.constant dense<0.000000e+00> : vector<2x10xf32>
    %4 = tpu.matmul %1, %3, %cst {dimension_numbers = #tpu.dot_dimension_numbers<[1], [0], [0], [1], [0, 0, 1, 1], [], []>} : vector<2x128xf32>, vector<128x10xf32>, vector<2x10xf32> -> vector<2x10xf32>
    %c1 = arith.constant 1 : index
    %c0_5 = arith.constant 0 : index
    %c0_6 = arith.constant 0 : index
    %5 = vector.load %arg0[%c1, %c0_5, %c0_6] : memref<2x2x128xf32, #tpu.memory_space<vmem>>, vector<1x2x128xf32>
    %6 = vector.shape_cast %5 : vector<1x2x128xf32> to vector<2x128xf32>
    %c1_7 = arith.constant 1 : index
    %c0_8 = arith.constant 0 : index
    %c0_9 = arith.constant 0 : index
    %7 = vector.load %arg1[%c1_7, %c0_8, %c0_9] : memref<2x128x10xf32, #tpu.memory_space<vmem>>, vector<1x128x10xf32>
    %8 = vector.shape_cast %7 : vector<1x128x10xf32> to vector<128x10xf32>
    %cst_10 = arith.constant dense<0.000000e+00> : vector<2x10xf32>
    %9 = tpu.matmul %6, %8, %cst_10 {dimension_numbers = #tpu.dot_dimension_numbers<[1], [0], [0], [1], [0, 0, 1, 1], [], []>} : vector<2x128xf32>, vector<128x10xf32>, vector<2x10xf32> -> vector<2x10xf32>
    %10 = arith.addf %4, %9 : vector<2x10xf32>
    %c0_11 = arith.constant 0 : index
    %c0_12 = arith.constant 0 : index
    %11 = vector.load %arg2[%c0_11, %c0_12] : memref<1x10xf32, #tpu.memory_space<vmem>>, vector<1x10xf32>
    %12 = vector.broadcast %11 : vector<1x10xf32> to vector<2x10xf32>
    %13 = arith.addf %10, %12 : vector<2x10xf32>
    %c0_13 = arith.constant 0 : index
    %c0_14 = arith.constant 0 : index
    %14 = vector.load %arg3[%c0_13, %c0_14] : memref<2x10xf32, #tpu.memory_space<vmem>>, vector<2x10xf32>
    tpu.vector_store %arg3[%c0_13, %c0_14], %13 {strides = array<i32>} : memref<2x10xf32, #tpu.memory_space<vmem>>, vector<2x10xf32>,
    return
  }
}

</mosaic_0001>

<llo_original>
// kernel: forward.5
$region0: #{forward.5}
  #allocation0 [shape = 'u32[]', space=smem, size = 0x4, offset = 0x4, fixed_abs, tag = 'smem constant byte address 0x4 - core index']
  #allocation1 [shape = 'u32[72,128]{1,0:T(1,128)}', space=vmem, size = 0x9000, scoped, tag = 'internal scratch']
  %s0 = inlined_call_operand.vmem [shape: f32[2,2,128], index: 0, kind: input, shape index: {}]
  %s1 = inlined_call_operand.vmem [shape: f32[2,128,10], index: 1, kind: input, shape index: {}]
  %s2 = inlined_call_operand.vmem [shape: f32[1,10], index: 2, kind: input, shape index: {}]
  %s3 = inlined_call_operand.hbm [shape: f32[2,10], index: 3, kind: output, shape index: {}]
  %s4 = sld [smem:[#allocation0]]
  $region22: #{forward.5} parent=0
    _
  %s6 = ssub.s32 1, %s4
  %s7 = scalar_select 0, %s6, %s4
  $region1: #{forward.5} parent=0
    #allocation2 [shape = 'u8[1024]{0}', space=vmem, size = 0x400, scoped, tag = 'output window, operand 0, single buffered']
    #allocation3 [shape = 's32[1]{0}', space=sflag, size = 0x4, scoped, tag = 'scoped memory for forward.5']
    %8 = vsyncpa [#allocation3], 0
    // Predicated region
    $region2: #{forward.5} parent=1 // pred_check
      _
    $region3: #{forward.5} parent=1 // pred_check_branch
      %10 = sbr.rel (0) target = $region5
    $region4: #{forward.5} parent=1 // pred_region
      _
    $region5: #{forward.5} parent=1 // pred_fallthru
      _
    // Predicated region
    $region6: #{forward.5} parent=1 // pred_check
      _
    $region7: #{forward.5} parent=1 // pred_check_branch
      %12 = sbr.rel (0) target = $region9
    $region8: #{forward.5} parent=1 // pred_region
      _
    $region9: #{forward.5} parent=1 // pred_fallthru
      _
    // Predicated region
    $region10: #{forward.5} parent=1 // pred_check
      _
    $region11: #{forward.5} parent=1 // pred_check_branch
      %14 = sbr.rel (0) target = $region13
    $region12: #{forward.5} parent=1 // pred_region
      _
    $region13: #{forward.5} parent=1 // pred_fallthru
      _
    %v15 = vld [vmem:[%s0] sm:$0x3]
    %v16 = vld [vmem:[%s1] sm:$0xff]
    %v17 = vld [vmem:[%s1 + $0x8] sm:$0xff]
    %v18 = vld [vmem:[%s1 + $0x10] sm:$0xff]
    %v19 = vld [vmem:[%s1 + $0x18] sm:$0xff]
    %v20 = vld [vmem:[%s1 + $0x20] sm:$0xff]
    %v21 = vld [vmem:[%s1 + $0x28] sm:$0xff]
    %v22 = vld [vmem:[%s1 + $0x30] sm:$0xff]
    %v23 = vld [vmem:[%s1 + $0x38] sm:$0xff]
    %v24 = vld [vmem:[%s1 + $0x40] sm:$0xff]
    %v25 = vld [vmem:[%s1 + $0x48] sm:$0xff]
    %v26 = vld [vmem:[%s1 + $0x50] sm:$0xff]
    %v27 = vld [vmem:[%s1 + $0x58] sm:$0xff]
    %v28 = vld [vmem:[%s1 + $0x60] sm:$0xff]
    %v29 = vld [vmem:[%s1 + $0x68] sm:$0xff]
    %v30 = vld [vmem:[%s1 + $0x70] sm:$0xff]
    %v31 = vld [vmem:[%s1 + $0x78] sm:$0xff]
    %s32 = scalar_lea.vmem %s0, 2
    %v33 = vld [vmem:[%s32] sm:$0x3]
    %s34 = scalar_lea.vmem %s1, 128
    %v35 = vld [vmem:[%s34] sm:$0xff]
    %v36 = vld [vmem:[%s34 + $0x8] sm:$0xff]
    %v37 = vld [vmem:[%s34 + $0x10] sm:$0xff]
    %v38 = vld [vmem:[%s34 + $0x18] sm:$0xff]
    %v39 = vld [vmem:[%s34 + $0x20] sm:$0xff]
    %v40 = vld [vmem:[%s34 + $0x28] sm:$0xff]
    %v41 = vld [vmem:[%s34 + $0x30] sm:$0xff]
    %v42 = vld [vmem:[%s34 + $0x38] sm:$0xff]
    %v43 = vld [vmem:[%s34 + $0x40] sm:$0xff]
    %v44 = vld [vmem:[%s34 + $0x48] sm:$0xff]
    %v45 = vld [vmem:[%s34 + $0x50] sm:$0xff]
    %v46 = vld [vmem:[%s34 + $0x58] sm:$0xff]
    %v47 = vld [vmem:[%s34 + $0x60] sm:$0xff]
    %v48 = vld [vmem:[%s34 + $0x68] sm:$0xff]
    %v49 = vld [vmem:[%s34 + $0x70] sm:$0xff]
    %v50 = vld [vmem:[%s34 + $0x78] sm:$0xff]
    %51 = vmatpush.msra.mxu0 %v50
    %52 = vmatpush.msra.mxu0 %v49
    %53 = vmatpush.msra.mxu0 %v48
    %54 = vmatpush.msra.mxu0 %v47
    %55 = vmatpush.msra.mxu0 %v46
    %56 = vmatpush.msra.mxu0 %v45
    %57 = vmatpush.msra.mxu0 %v44
    %58 = vmatpush.msra.mxu0 %v43
    %59 = vmatpush.msra.mxu0 %v42
    %60 = vmatpush.msra.mxu0 %v41
    %61 = vmatpush.msra.mxu0 %v40
    %62 = vmatpush.msra.mxu0 %v39
    %63 = vmatpush.msra.mxu0 %v38
    %64 = vmatpush.msra.mxu0 %v37
    %65 = vmatpush.msra.mxu0 %v36
    %66 = vmatpush.msra.mxu0 %v35
    %67 = vmatmul.f32.gmra.mxu0 %v33
    %v68 = vpop.f32.mrf.mxu0
    %v69 = vadd.f32 0.0, %v68
    %70 = vdwg.mxu0
    %71 = vmatpush.msra.mxu0 %v31
    %72 = vmatpush.msra.mxu0 %v30
    %73 = vmatpush.msra.mxu0 %v29
    %74 = vmatpush.msra.mxu0 %v28
    %75 = vmatpush.msra.mxu0 %v27
    %76 = vmatpush.msra.mxu0 %v26
    %77 = vmatpush.msra.mxu0 %v25
    %78 = vmatpush.msra.mxu0 %v24
    %79 = vmatpush.msra.mxu0 %v23
    %80 = vmatpush.msra.mxu0 %v22
    %81 = vmatpush.msra.mxu0 %v21
    %82 = vmatpush.msra.mxu0 %v20
    %83 = vmatpush.msra.mxu0 %v19
    %84 = vmatpush.msra.mxu0 %v18
    %85 = vmatpush.msra.mxu0 %v17
    %86 = vmatpush.msra.mxu0 %v16
    %87 = vmatmul.f32.gmra.mxu0 %v15
    %v88 = vpop.f32.mrf.mxu0
    %v89 = vadd.f32 %v69, %v88
    %90 = vdwg.mxu0
    %v91 = vld [vmem:[%s2] sm:$0x1]
    %v93 = vperm.slane %v91, 0
    %v95 = vadd.f32 %v89, %v93
    %vm96 = vcmask 74752
    %97 = vst.msk [vmem:[#allocation2] sm:$0x3] %vm96, %v95
    // Predicated region
    $region14: #{forward.5} parent=1 // pred_check
      _
    $region15: #{forward.5} parent=1 // pred_check_branch
      %99 = sbr.rel (0) target = $region17
    $region16: #{forward.5} parent=1 // pred_region
      %101 = vsyncadd [#allocation3], 0
      %s103 = sshll.u32 [#allocation2], 4
      %s104 = int_to_ptr.vmem [resolvable:$true] %s103
      %s105 = sshll.u32 %s3, 4
      %s106 = int_to_ptr.hbm [resolvable:$true] %s105
      %108 = dma.vmem_to_hbm [thread:$0]  %s104, 32, %s106, [#allocation3]
    $region17: #{forward.5} parent=1 // pred_fallthru
      _
    // Predicated region
    $region18: #{forward.5} parent=1 // pred_check
      _
    $region19: #{forward.5} parent=1 // pred_check_branch
      %110 = sbr.rel (0) target = $region21
    $region20: #{forward.5} parent=1 // pred_region
      %112 = dma.done [#allocation3], 32
    $region21: #{forward.5} parent=1 // pred_fallthru
      _
    %113 = vsyncpa [#allocation3], 1

// kernel: forward.4
$region0: #{forward.4}
  #allocation0 [shape = 'u32[]', space=smem, size = 0x4, offset = 0x4, fixed_abs, tag = 'smem constant byte address 0x4 - core index']
  #allocation1 [shape = 'u32[72,128]{1,0:T(1,128)}', space=vmem, size = 0x9000, scoped, tag = 'internal scratch']
  %s0 = inlined_call_operand.vmem [shape: f32[2,4,2,256], index: 0, kind: input, shape index: {}]
  %s1 = inlined_call_operand.vmem [shape: f32[32,128], index: 1, kind: input, shape index: {}]
  %s2 = inlined_call_operand.vmem [shape: f32[32,128], index: 2, kind: input, shape index: {}]
  %s3 = inlined_call_operand.vmem [shape: f32[2,4,64,128], index: 3, kind: input, shape index: {}]
  %s4 = inlined_call_operand.vmem [shape: f32[2,1,128], index: 4, kind: input, shape index: {}]
  %s5 = inlined_call_operand.vmem [shape: f32[2,2,128], index: 5, kind: output, shape index: {}]
  %s6 = sld [smem:[#allocation0]]
  $region60: #{forward.4} parent=0
    _
  %s8 = ssub.s32 1, %s6
  %s9 = scalar_select 0, %s8, %s6
  loop: start=0, step=1, limit=4
  $region2: #{forward.4} parent=0 // loop_pre_header
    _
  $region3: #{forward.4} parent=0 // loop_header
    %s11 = sphi 0, %s15
    %p12 = scmp.ge.s32.totalorder %s11, 4
    %s21 = sphi 0, %s23
    %s24 = sphi 0, %s21
    %s25 = sphi 0, %s24
    %s41 = sphi 0, %s25
    %s45 = sphi 0, %s45
    %s47 = sphi 0, %s45
    %s48 = sphi 0, %s47
    %s62 = sphi 0, %s48
    %s66 = sphi 0, %s66
    %s68 = sphi 0, %s66
    %s69 = sphi 0, %s68
    %s83 = sphi 0, %s69
    %s89 = sphi 0, %s91
    %s92 = sphi 0, %s89
    %s93 = sphi 0, %s92
    %s109 = sphi 0, %s93
    %s115 = sphi 0, %s117
    %s118 = sphi 0, %s115
    %s119 = sphi 0, %s118
    %s135 = sphi 0, %s119
    %s141 = sphi 0, %s143
    %s144 = sphi 0, %s141
    %s145 = sphi 0, %s144
    %s161 = sphi 0, %s145
  $region4: #{forward.4} parent=0 // loop_header_branch
    %14 = sbr.rel (%p12) target = $region8
  $region5: #{forward.4} parent=0 // loop_body
    %s16 = ssub.s32 %s11, 1
    %s17 = ssub.s32 %s11, 2
    %s18 = sadd.s32 %s11, 1
    %s19 = ssub.s32 %s11, %s18
    %p20 = scmp.eq.s32.totalorder %s19, 0
    %s22 = sadd.s32 %s21, 1
    %s23 = scalar_select %p20, %s21, %s22
    %p26 = pneg %p20
    %p27 = scmp.eq.s32.totalorder %s11, 1
    %p28 = por %p26, %p27
    %p29 = scmp.ne.s32.totalorder %s21, %s24
    %p30 = scmp.eq.s32.totalorder %s11, 0
    %p31 = por %p29, %p30
    %p32 = scmp.ne.s32.totalorder %s21, %s24
    %p33 = scmp.eq.s32.totalorder %s16, 1
    %p34 = por %p32, %p33
    %p35 = scmp.ne.s32.totalorder %s24, %s25
    %p36 = scmp.eq.s32.totalorder %s16, 0
    %p37 = por %p35, %p36
    %p38 = scmp.ne.s32.totalorder %s24, %s25
    %p39 = scmp.eq.s32.totalorder %s17, 1
    %p40 = por %p38, %p39
    %p42 = scmp.ne.s32.totalorder %s25, %s41
    %p43 = scmp.eq.s32.totalorder %s17, 0
    %p44 = por %p42, %p43
    %s46 = sadd.s32 %s45, 1
    %p49 = scmp.eq.s32.totalorder %s11, 1
    %p50 = scmp.ne.s32.totalorder %s45, %s47
    %p51 = scmp.eq.s32.totalorder %s11, 0
    %p52 = por %p50, %p51
    %p53 = scmp.ne.s32.totalorder %s45, %s47
    %p54 = scmp.eq.s32.totalorder %s16, 1
    %p55 = por %p53, %p54
    %p56 = scmp.ne.s32.totalorder %s47, %s48
    %p57 = scmp.eq.s32.totalorder %s16, 0
    %p58 = por %p56, %p57
    %p59 = scmp.ne.s32.totalorder %s47, %s48
    %p60 = scmp.eq.s32.totalorder %s17, 1
    %p61 = por %p59, %p60
    %p63 = scmp.ne.s32.totalorder %s48, %s62
    %p64 = scmp.eq.s32.totalorder %s17, 0
    %p65 = por %p63, %p64
    %s67 = sadd.s32 %s66, 1
    %p70 = scmp.eq.s32.totalorder %s11, 1
    %p71 = scmp.ne.s32.totalorder %s66, %s68
    %p72 = scmp.eq.s32.totalorder %s11, 0
    %p73 = por %p71, %p72
    %p74 = scmp.ne.s32.totalorder %s66, %s68
    %p75 = scmp.eq.s32.totalorder %s16, 1
    %p76 = por %p74, %p75
    %p77 = scmp.ne.s32.totalorder %s68, %s69
    %p78 = scmp.eq.s32.totalorder %s16, 0
    %p79 = por %p77, %p78
    %p80 = scmp.ne.s32.totalorder %s68, %s69
    %p81 = scmp.eq.s32.totalorder %s17, 1
    %p82 = por %p80, %p81
    %p84 = scmp.ne.s32.totalorder %s69, %s83
    %p85 = scmp.eq.s32.totalorder %s17, 0
    %p86 = por %p84, %p85
    %s87 = ssub.s32 %s11, %s18
    %p88 = scmp.eq.s32.totalorder %s87, 0
    %s90 = sadd.s32 %s89, 1
    %s91 = scalar_select %p88, %s89, %s90
    %p94 = pneg %p88
    %p95 = scmp.eq.s32.totalorder %s11, 1
    %p96 = por %p94, %p95
    %p97 = scmp.ne.s32.totalorder %s89, %s92
    %p98 = scmp.eq.s32.totalorder %s11, 0
    %p99 = por %p97, %p98
    %p100 = scmp.ne.s32.totalorder %s89, %s92
    %p101 = scmp.eq.s32.totalorder %s16, 1
    %p102 = por %p100, %p101
    %p103 = scmp.ne.s32.totalorder %s92, %s93
    %p104 = scmp.eq.s32.totalorder %s16, 0
    %p105 = por %p103, %p104
    %p106 = scmp.ne.s32.totalorder %s92, %s93
    %p107 = scmp.eq.s32.totalorder %s17, 1
    %p108 = por %p106, %p107
    %p110 = scmp.ne.s32.totalorder %s93, %s109
    %p111 = scmp.eq.s32.totalorder %s17, 0
    %p112 = por %p110, %p111
    %s113 = ssub.s32 %s11, %s18
    %p114 = scmp.eq.s32.totalorder %s113, 0
    %s116 = sadd.s32 %s115, 1
    %s117 = scalar_select %p114, %s115, %s116
    %p120 = pneg %p114
    %p121 = scmp.eq.s32.totalorder %s11, 1
    %p122 = por %p120, %p121
    %p123 = scmp.ne.s32.totalorder %s115, %s118
    %p124 = scmp.eq.s32.totalorder %s11, 0
    %p125 = por %p123, %p124
    %p126 = scmp.ne.s32.totalorder %s115, %s118
    %p127 = scmp.eq.s32.totalorder %s16, 1
    %p128 = por %p126, %p127
    %p129 = scmp.ne.s32.totalorder %s118, %s119
    %p130 = scmp.eq.s32.totalorder %s16, 0
    %p131 = por %p129, %p130
    %p132 = scmp.ne.s32.totalorder %s118, %s119
    %p133 = scmp.eq.s32.totalorder %s17, 1
    %p134 = por %p132, %p133
    %p136 = scmp.ne.s32.totalorder %s119, %s135
    %p137 = scmp.eq.s32.totalorder %s17, 0
    %p138 = por %p136, %p137
    %s139 = ssub.s32 %s11, %s18
    %p140 = scmp.eq.s32.totalorder %s139, 0
    %s142 = sadd.s32 %s141, 1
    %s143 = scalar_select %p140, %s141, %s142
    %p146 = pneg %p140
    %p147 = scmp.eq.s32.totalorder %s11, 1
    %p148 = por %p146, %p147
    %p149 = scmp.ne.s32.totalorder %s141, %s144
    %p150 = scmp.eq.s32.totalorder %s11, 0
    %p151 = por %p149, %p150
    %p152 = scmp.ne.s32.totalorder %s141, %s144
    %p153 = scmp.eq.s32.totalorder %s16, 1
    %p154 = por %p152, %p153
    %p155 = scmp.ne.s32.totalorder %s144, %s145
    %p156 = scmp.eq.s32.totalorder %s16, 0
    %p157 = por %p155, %p156
    %p158 = scmp.ne.s32.totalorder %s144, %s145
    %p159 = scmp.eq.s32.totalorder %s17, 1
    %p160 = por %p158, %p159
    %p162 = scmp.ne.s32.totalorder %s145, %s161
    %p163 = scmp.eq.s32.totalorder %s17, 0
    %p164 = por %p162, %p163
    %p165 = scmp.le.s32.totalorder 1, %s11
    %p166 = scmp.lt.s32.totalorder %s11, 3
    %p167 = pnand %p165, %p166
    %p168 = pneg %p167
    // Predicated region
    $region9: #{forward.4} parent=5 // pred_check
      _
    $region10: #{forward.4} parent=5 // pred_check_branch
      %170 = sbr.rel (%p167) target = $region12
    $region11: #{forward.4} parent=5 // pred_region
      %s171 = ssub.s32 %s11, 1
      // Predicated region
      $region13: #{forward.4} parent=11 // pred_check
        %p172 = pneg %p58
      $region14: #{forward.4} parent=11 // pred_check_branch
        %174 = sbr.rel (%p172) target = $region16
      $region15: #{forward.4} parent=11 // pred_region
        _
      $region16: #{forward.4} parent=11 // pred_fallthru
        _
      // Predicated region
      $region17: #{forward.4} parent=11 // pred_check
        %p175 = pneg %p79
      $region18: #{forward.4} parent=11 // pred_check_branch
        %177 = sbr.rel (%p175) target = $region20
      $region19: #{forward.4} parent=11 // pred_region
        _
      $region20: #{forward.4} parent=11 // pred_fallthru
        _
    $region12: #{forward.4} parent=5 // pred_fallthru
      _
    %p178 = scmp.lt.s32.totalorder %s11, 2
    // Predicated region
    $region21: #{forward.4} parent=5 // pred_check
      %p179 = pneg %p178
    $region22: #{forward.4} parent=5 // pred_check_branch
      %181 = sbr.rel (%p179) target = $region24
    $region23: #{forward.4} parent=5 // pred_region
      // Predicated region
      $region25: #{forward.4} parent=23 // pred_check
        %p182 = pneg %p31
      $region26: #{forward.4} parent=23 // pred_check_branch
        %184 = sbr.rel (%p182) target = $region28
      $region27: #{forward.4} parent=23 // pred_region
        %p185 = scmp.lt.s32.totalorder %s11, 1
        %s186 = scalar_select %p185, %s11, 1
        %s187 = smul.addr %s186, 8
        %s188 = smul.addr %s187, 2
        %s189 = scalar_lea.vmem %s0, %s188
      $region28: #{forward.4} parent=23 // pred_fallthru
        _
      // Predicated region
      $region29: #{forward.4} parent=23 // pred_check
        %p190 = pneg %p99
      $region30: #{forward.4} parent=23 // pred_check_branch
        %192 = sbr.rel (%p190) target = $region32
      $region31: #{forward.4} parent=23 // pred_region
        %p193 = scmp.lt.s32.totalorder %s11, 1
        %s194 = scalar_select %p193, %s11, 1
        %s195 = smul.addr %s194, 32
        %s196 = smul.addr %s195, 8
        %s197 = scalar_lea.vmem %s3, %s196
      $region32: #{forward.4} parent=23 // pred_fallthru
        _
      // Predicated region
      $region33: #{forward.4} parent=23 // pred_check
        %p198 = pneg %p125
      $region34: #{forward.4} parent=23 // pred_check_branch
        %200 = sbr.rel (%p198) target = $region36
      $region35: #{forward.4} parent=23 // pred_region
        %p201 = scmp.lt.s32.totalorder %s11, 1
        %s202 = scalar_select %p201, %s11, 1
        %s203 = scalar_lea.vmem %s4, %s202
      $region36: #{forward.4} parent=23 // pred_fallthru
        _
    $region24: #{forward.4} parent=5 // pred_fallthru
      _
    %p204 = scmp.le.s32.totalorder 1, %s11
    %p205 = scmp.lt.s32.totalorder %s11, 3
    %p206 = pnand %p204, %p205
    %p207 = pneg %p206
    // Predicated region
    $region37: #{forward.4} parent=5 // pred_check
      _
    $region38: #{forward.4} parent=5 // pred_check_branch
      %209 = sbr.rel (%p206) target = $region40
    $region39: #{forward.4} parent=5 // pred_region
      %s210 = ssub.s32 %s11, 1
      %p211 = scmp.lt.s32.totalorder %s16, 1
      %s212 = scalar_select %p211, %s16, 1
      %s213 = smul.addr %s212, 8
      %s214 = smul.addr %s213, 2
      %s215 = scalar_lea.vmem %s0, %s214
      %p216 = pneg %p37
      %p217 = pneg %p34
      %p218 = pneg %p58
      %p219 = pneg %p55
      %p220 = pneg %p79
      %p221 = pneg %p76
      %p222 = scmp.lt.s32.totalorder %s16, 1
      %s223 = scalar_select %p222, %s16, 1
      %s224 = smul.addr %s223, 32
      %s225 = smul.addr %s224, 8
      %s226 = scalar_lea.vmem %s3, %s225
      %p227 = pneg %p105
      %p228 = pneg %p102
      %p229 = scmp.lt.s32.totalorder %s16, 1
      %s230 = scalar_select %p229, %s16, 1
      %s231 = scalar_lea.vmem %s4, %s230
      %p232 = pneg %p131
      %p233 = pneg %p128
      %p234 = pneg %p157
      %p235 = pneg %p154
      %p236 = scmp.lt.s32.totalorder %s16, 1
      %s237 = scalar_select %p236, %s16, 1
      %s238 = smul.addr %s237, 2
      %s239 = scalar_lea.vmem %s5, %s238
      %p240 = scmp.lt.s32.totalorder %s16, 1
      %s241 = scalar_select %p240, %s16, 1
      %s242 = smul.addr %s241, 8
      %s243 = smul.addr %s242, 2
      %s244 = scalar_lea.vmem %s0, %s243
      %p245 = scmp.lt.s32.totalorder %s16, 1
      %s246 = scalar_select %p245, %s16, 1
      %s247 = smul.addr %s246, 32
      %s248 = smul.addr %s247, 8
      %s249 = scalar_lea.vmem %s3, %s248
      %p250 = scmp.lt.s32.totalorder %s16, 1
      %s251 = scalar_select %p250, %s16, 1
      %s252 = scalar_lea.vmem %s4, %s251
      %p253 = scmp.lt.s32.totalorder %s16, 1
      %s254 = scalar_select %p253, %s16, 1
      %s255 = smul.addr %s254, 2
      %s256 = scalar_lea.vmem %s5, %s255
      %v257 = vld [vmem:[%s1] sm:$0xff]
      %v258 = vld [vmem:[%s1 + $0x8] sm:$0xff]
      %v259 = vld [vmem:[%s1 + $0x10] sm:$0xff]
      %v260 = vld [vmem:[%s1 + $0x18] sm:$0xff]
      %v261 = vld [vmem:[%s2] sm:$0xff]
      %v262 = vld [vmem:[%s2 + $0x8] sm:$0xff]
      %v263 = vld [vmem:[%s2 + $0x10] sm:$0xff]
      %v264 = vld [vmem:[%s2 + $0x18] sm:$0xff]
      loop: start=0, step=1, limit=4
      $region41: #{forward.4} parent=39 // loop_pre_header
        _
      $region42: #{forward.4} parent=39 // loop_header
        %s266 = sphi 0, %s270
        %p267 = scmp.ge.s32.totalorder %s266, 4
        %v271 = vphi 0.0, %v376
        %v272 = vphi 0.0, %v370
        %v273 = vphi 0.0, %v413
        %v274 = vphi 0.0, %v407
        %v275 = vphi 0.0, %v479
      $region43: #{forward.4} parent=39 // loop_header_branch
        %269 = sbr.rel (%p267) target = $region47
      $region44: #{forward.4} parent=39 // loop_body
        %s276 = smul.u32 %s266, 2
        %s277 = smul.addr %s276, 2
        %s278 = scalar_lea.vmem %s244, %s277
        %v279 = vld [vmem:[%s278] sm:$0xf]
        %281 = vst [vmem:[#allocation1] ss:$4 sm:$0xff] %v271
        %v282 = vld.sshfl [vmem:[#allocation1] sm:$0xff pattern:$0x73625140]
        %283 = vrot.lane.b32.xlu0 %v282, 32
        %v284 = vpop.permute.xlu0 %283
        %vm285 = vcmask 261120
        %v286 = vsel %vm285, %v284, 0
        %288 = vmatpush.msra.mxu0 0.0
        %289 = vmatpush.msra.mxu0 0.0
        %290 = vmatpush.msra.mxu0 0.0
        %291 = vmatpush.msra.mxu0 0.0
        %292 = vmatpush.msra.mxu0 0.0
        %293 = vmatpush.msra.mxu0 0.0
        %294 = vmatpush.msra.mxu0 0.0
        %295 = vmatpush.msra.mxu0 0.0
        %296 = vmatpush.msra.mxu0 0.0
        %297 = vmatpush.msra.mxu0 0.0
        %298 = vmatpush.msra.mxu0 0.0
        %299 = vmatpush.msra.mxu0 0.0
        %300 = vmatpush.msra.mxu0 %v260
        %301 = vmatpush.msra.mxu0 %v259
        %302 = vmatpush.msra.mxu0 %v258
        %303 = vmatpush.msra.mxu0 %v257
        %304 = vmatmul.f32.gmra.mxu0 %v286
        %v305 = vpop.f32.mrf.mxu0
        %v306 = vadd.f32 0.0, %v305
        %307 = vdwg.mxu0
        %v308 = vadd.f32 %v279, %v306
        %310 = vst [vmem:[#allocation1] ss:$4 sm:$0xff] %v273
        %v311 = vld.sshfl [vmem:[#allocation1] sm:$0xff pattern:$0x73625140]
        %312 = vrot.lane.b32.xlu0 %v311, 32
        %v313 = vpop.permute.xlu0 %312
        %v314 = vsel %vm285, %v313, 0
        %316 = vmatpush.msra.mxu0 0.0
        %317 = vmatpush.msra.mxu0 0.0
        %318 = vmatpush.msra.mxu0 0.0
        %319 = vmatpush.msra.mxu0 0.0
        %320 = vmatpush.msra.mxu0 0.0
        %321 = vmatpush.msra.mxu0 0.0
        %322 = vmatpush.msra.mxu0 0.0
        %323 = vmatpush.msra.mxu0 0.0
        %324 = vmatpush.msra.mxu0 0.0
        %325 = vmatpush.msra.mxu0 0.0
        %326 = vmatpush.msra.mxu0 0.0
        %327 = vmatpush.msra.mxu0 0.0
        %328 = vmatpush.msra.mxu0 %v264
        %329 = vmatpush.msra.mxu0 %v263
        %330 = vmatpush.msra.mxu0 %v262
        %331 = vmatpush.msra.mxu0 %v261
        %332 = vmatmul.f32.gmra.mxu0 %v314
        %v333 = vpop.f32.mrf.mxu0
        %v334 = vadd.f32 0.0, %v333
        %335 = vdwg.mxu0
        %v337 = vrot.slane %v279, 2
        %v339 = vadd.f32 %v337, %v334
        %v340 = vxor.u32 %v308, 2147483648
        %v341 = vmul.f32 %v340, 1.442695
        %v342 = vpow.pop %v341
        %v343 = vadd.f32 %v342, 1.0
        %v344 = vrcp.pop %v343
        %v345 = vmul.f32 %v343, %v344
        %v346 = vsub.f32 1.0, %v345
        %v347 = vmul.f32 %v344, %v346
        %v348 = vadd.f32 %v344, %v347
        %vm349 = vweird.f32 %v343
        %vm350 = vweird.f32 %v344
        %vm351 = vmor %vm349, %vm350
        %v352 = vsel %vm351, %v344, %v348
        %v353 = vand.u32 2147483647, %v343
        %vm354 = vcmp.eq.f32.partialorder %v353, 8.507059e+37
        %v355 = vand.u32 %v343, 2147483648
        %v356 = vor.u32 1.1754944e-38, %v355
        %v357 = vsel %vm354, %v356, %v352
        %v358 = vmul.f32 1.0, %v357
        %v359 = vtanh.pop %v308
        %v360 = vmul.f32 %v358, %v272
        %362 = vrot.lane.b32.xlu0 %v359, 64
        %v363 = vpop.permute.xlu0 %362
        %v365 = vmul.f32 %v358, %v363
        %367 = vrot.lane.b32.xlu0 %v365, 32
        %v368 = vpop.permute.xlu0 %367
        %v370 = vadd.f32 %v360, %v368
        %v371 = vtanh.pop %v370
        %373 = vrot.lane.b32.xlu0 %v371, 64
        %v374 = vpop.permute.xlu0 %373
        %v376 = vmul.f32 %v358, %v374
        %v377 = vxor.u32 %v339, 2147483648
        %v378 = vmul.f32 %v377, 1.442695
        %v379 = vpow.pop %v378
        %v380 = vadd.f32 %v379, 1.0
        %v381 = vrcp.pop %v380
        %v382 = vmul.f32 %v380, %v381
        %v383 = vsub.f32 1.0, %v382
        %v384 = vmul.f32 %v381, %v383
        %v385 = vadd.f32 %v381, %v384
        %vm386 = vweird.f32 %v380
        %vm387 = vweird.f32 %v381
        %vm388 = vmor %vm386, %vm387
        %v389 = vsel %vm388, %v381, %v385
        %v390 = vand.u32 2147483647, %v380
        %vm391 = vcmp.eq.f32.partialorder %v390, 8.507059e+37
        %v392 = vand.u32 %v380, 2147483648
        %v393 = vor.u32 1.1754944e-38, %v392
        %v394 = vsel %vm391, %v393, %v389
        %v395 = vmul.f32 1.0, %v394
        %v396 = vtanh.pop %v339
        %v397 = vmul.f32 %v395, %v274
        %399 = vrot.lane.b32.xlu0 %v396, 64
        %v400 = vpop.permute.xlu0 %399
        %v402 = vmul.f32 %v395, %v400
        %404 = vrot.lane.b32.xlu0 %v402, 32
        %v405 = vpop.permute.xlu0 %404
        %v407 = vadd.f32 %v397, %v405
        %v408 = vtanh.pop %v407
        %410 = vrot.lane.b32.xlu0 %v408, 64
        %v411 = vpop.permute.xlu0 %410
        %v413 = vmul.f32 %v395, %v411
        %s414 = smul.u32 %s266, 64
        %s415 = scalar_lea.vmem %s249, %s414
        %v416 = vld [vmem:[%s415] sm:$0xff]
        %v417 = vld [vmem:[%s415 + $0x8] sm:$0xff]
        %v418 = vld [vmem:[%s415 + $0x10] sm:$0xff]
        %v419 = vld [vmem:[%s415 + $0x18] sm:$0xff]
        %v420 = vld [vmem:[%s415 + $0x20] sm:$0xff]
        %v421 = vld [vmem:[%s415 + $0x28] sm:$0xff]
        %v422 = vld [vmem:[%s415 + $0x30] sm:$0xff]
        %v423 = vld [vmem:[%s415 + $0x38] sm:$0xff]
        %425 = vst [vmem:[#allocation1] ss:$4 sm:$0xff] %v376
        %v426 = vld.sshfl [vmem:[#allocation1] sm:$0xff pattern:$0x73625140]
        %427 = vrot.lane.b32.xlu0 %v426, 32
        %v428 = vpop.permute.xlu0 %427
        %v429 = vsel %vm285, %v428, 0
        %431 = vmatpush.msra.mxu0 0.0
        %432 = vmatpush.msra.mxu0 0.0
        %433 = vmatpush.msra.mxu0 0.0
        %434 = vmatpush.msra.mxu0 0.0
        %435 = vmatpush.msra.mxu0 0.0
        %436 = vmatpush.msra.mxu0 0.0
        %437 = vmatpush.msra.mxu0 0.0
        %438 = vmatpush.msra.mxu0 0.0
        %439 = vmatpush.msra.mxu0 0.0
        %440 = vmatpush.msra.mxu0 0.0
        %441 = vmatpush.msra.mxu0 0.0
        %442 = vmatpush.msra.mxu0 0.0
        %443 = vmatpush.msra.mxu0 %v419
        %444 = vmatpush.msra.mxu0 %v418
        %445 = vmatpush.msra.mxu0 %v417
        %446 = vmatpush.msra.mxu0 %v416
        %447 = vmatmul.f32.gmra.mxu0 %v429
        %v448 = vpop.f32.mrf.mxu0
        %v449 = vadd.f32 0.0, %v448
        %450 = vdwg.mxu0
        %v451 = vadd.f32 %v275, %v449
        %453 = vst [vmem:[#allocation1] ss:$4 sm:$0xff] %v413
        %v454 = vld.sshfl [vmem:[#allocation1] sm:$0xff pattern:$0x73625140]
        %455 = vrot.lane.b32.xlu0 %v454, 32
        %v456 = vpop.permute.xlu0 %455
        %v457 = vsel %vm285, %v456, 0
        %459 = vmatpush.msra.mxu0 0.0
        %460 = vmatpush.msra.mxu0 0.0
        %461 = vmatpush.msra.mxu0 0.0
        %462 = vmatpush.msra.mxu0 0.0
        %463 = vmatpush.msra.mxu0 0.0
        %464 = vmatpush.msra.mxu0 0.0
        %465 = vmatpush.msra.mxu0 0.0
        %466 = vmatpush.msra.mxu0 0.0
        %467 = vmatpush.msra.mxu0 0.0
        %468 = vmatpush.msra.mxu0 0.0
        %469 = vmatpush.msra.mxu0 0.0
        %470 = vmatpush.msra.mxu0 0.0
        %471 = vmatpush.msra.mxu0 %v423
        %472 = vmatpush.msra.mxu0 %v422
        %473 = vmatpush.msra.mxu0 %v421
        %474 = vmatpush.msra.mxu0 %v420
        %475 = vmatmul.f32.gmra.mxu0 %v457
        %v476 = vpop.f32.mrf.mxu0
        %v477 = vadd.f32 0.0, %v476
        %478 = vdwg.mxu0
        %v479 = vadd.f32 %v451, %v477
      $region45: #{forward.4} parent=39 // loop_footer
        %s270 = sadd.s32 1, %s266
      $region46: #{forward.4} parent=39 // loop_footer_branch
        %265 = sbr.rel target = $region42
      $region47: #{forward.4} parent=39 // loop_exit
        _
      %v480 = vld [vmem:[%s252] sm:$0x1]
      %v482 = vperm.slane %v480, 0
      %v484 = vadd.f32 %v275, %v482
      %vm485 = vcmp.gt.f32.partialorder %v484, 0.0
      %v486 = vmul.f32 %v484, 0.01
      %v487 = vsel %vm485, %v484, %v486
      %488 = vst [vmem:[%s256] sm:$0x3] %v487
      %p489 = scmp.lt.s32.totalorder %s16, 1
      %s490 = scalar_select %p489, %s16, 1
      %s491 = smul.addr %s490, 2
      %s492 = scalar_lea.vmem %s5, %s491
      // Predicated region
      $region48: #{forward.4} parent=39 // pred_check
        %p493 = pneg %p154
      $region49: #{forward.4} parent=39 // pred_check_branch
        %495 = sbr.rel (%p493) target = $region51
      $region50: #{forward.4} parent=39 // pred_region
        _
      $region51: #{forward.4} parent=39 // pred_fallthru
        _
    $region40: #{forward.4} parent=5 // pred_fallthru
      _
    %p496 = scmp.le.s32.totalorder 2, %s11
    // Predicated region
    $region52: #{forward.4} parent=5 // pred_check
      %p497 = pneg %p496
    $region53: #{forward.4} parent=5 // pred_check_branch
      %499 = sbr.rel (%p497) target = $region55
    $region54: #{forward.4} parent=5 // pred_region
      %s500 = ssub.s32 %s11, 2
      // Predicated region
      $region56: #{forward.4} parent=54 // pred_check
        %p501 = pneg %p160
      $region57: #{forward.4} parent=54 // pred_check_branch
        %503 = sbr.rel (%p501) target = $region59
      $region58: #{forward.4} parent=54 // pred_region
        %p504 = scmp.lt.s32.totalorder %s17, 1
        %s505 = scalar_select %p504, %s17, 1
        %s506 = smul.addr %s505, 2
        %s507 = scalar_lea.vmem %s5, %s506
      $region59: #{forward.4} parent=54 // pred_fallthru
        _
    $region55: #{forward.4} parent=5 // pred_fallthru
      _
  $region6: #{forward.4} parent=0 // loop_footer
    %s15 = sadd.s32 1, %s11
  $region7: #{forward.4} parent=0 // loop_footer_branch
    %10 = sbr.rel target = $region3
  $region8: #{forward.4} parent=0 // loop_exit
    _

// kernel: forward.3
$region0: #{forward.3}
  #allocation0 [shape = 'u32[]', space=smem, size = 0x4, offset = 0x4, fixed_abs, tag = 'smem constant byte address 0x4 - core index']
  #allocation1 [shape = 'u32[72,128]{1,0:T(1,128)}', space=vmem, size = 0x9000, scoped, tag = 'internal scratch']
  %s0 = inlined_call_operand.vmem [shape: f32[2,2,11,128], index: 0, kind: input, shape index: {}]
  %s1 = inlined_call_operand.vmem [shape: f32[2,128,64], index: 1, kind: input, shape index: {}]
  %s2 = inlined_call_operand.vmem [shape: f32[2,1,64], index: 2, kind: input, shape index: {}]
  %s3 = inlined_call_operand.vmem [shape: f32[2,11,64], index: 3, kind: input, shape index: {}]
  %s4 = inlined_call_operand.vmem [shape: f32[2,11,64], index: 4, kind: input, shape index: {}]
  %s5 = inlined_call_operand.vmem [shape: f32[2,8,64,128], index: 5, kind: input, shape index: {}]
  %s6 = inlined_call_operand.vmem [shape: f32[2,1,128], index: 6, kind: input, shape index: {}]
  %s7 = inlined_call_operand.hbm [shape: f32[128,256], index: 7, kind: input, shape index: {}]
  %s8 = inlined_call_operand.vmem [shape: f32[1,256], index: 8, kind: input, shape index: {}]
  %s9 = inlined_call_operand.vmem [shape: f32[2,2,4,256], index: 9, kind: output, shape index: {}]
  %s10 = sld [smem:[#allocation0]]
  $region73: #{forward.3} parent=0
    _
  %s12 = ssub.s32 1, %s10
  %s13 = scalar_select 0, %s12, %s10
  $region1: #{forward.3} parent=0
    #allocation2 [shape = 'u8[131072]{0}', space=vmem, size = 0x20000, scoped, tag = 'input window, operand 7, single buffered']
    #allocation3 [shape = 's32[2]{0}', space=sflag, size = 0x8, scoped, tag = 'scoped memory for forward.3']
    %14 = vsyncpa [#allocation3], 0
    loop: start=0, step=1, limit=4
    $region2: #{forward.3} parent=1 // loop_pre_header
      _
    $region3: #{forward.3} parent=1 // loop_header
      %s16 = sphi 0, %s20
      %p17 = scmp.ge.s32.totalorder %s16, 4
      %s26 = sphi 0, %s28
      %s29 = sphi 0, %s26
      %s30 = sphi 0, %s29
      %s46 = sphi 0, %s30
      %s52 = sphi 0, %s54
      %s55 = sphi 0, %s52
      %s56 = sphi 0, %s55
      %s72 = sphi 0, %s56
      %s78 = sphi 0, %s80
      %s81 = sphi 0, %s78
      %s82 = sphi 0, %s81
      %s98 = sphi 0, %s82
      %s104 = sphi 0, %s106
      %s107 = sphi 0, %s104
      %s108 = sphi 0, %s107
      %s124 = sphi 0, %s108
      %s130 = sphi 0, %s132
      %s133 = sphi 0, %s130
      %s134 = sphi 0, %s133
      %s150 = sphi 0, %s134
      %s156 = sphi 0, %s158
      %s159 = sphi 0, %s156
      %s160 = sphi 0, %s159
      %s176 = sphi 0, %s160
      %s182 = sphi 0, %s184
      %s185 = sphi 0, %s182
      %s186 = sphi 0, %s185
      %s202 = sphi 0, %s186
      %s206 = sphi 0, %s206
      %s208 = sphi 0, %s206
      %s209 = sphi 0, %s208
      %s223 = sphi 0, %s209
      %s227 = sphi 0, %s227
      %s229 = sphi 0, %s227
      %s230 = sphi 0, %s229
      %s244 = sphi 0, %s230
      %s250 = sphi 0, %s252
      %s253 = sphi 0, %s250
      %s254 = sphi 0, %s253
      %s270 = sphi 0, %s254
    $region4: #{forward.3} parent=1 // loop_header_branch
      %19 = sbr.rel (%p17) target = $region8
    $region5: #{forward.3} parent=1 // loop_body
      %s21 = ssub.s32 %s16, 1
      %s22 = ssub.s32 %s16, 2
      %s23 = sadd.s32 %s16, 1
      %s24 = ssub.s32 %s16, %s23
      %p25 = scmp.eq.s32.totalorder %s24, 0
      %s27 = sadd.s32 %s26, 1
      %s28 = scalar_select %p25, %s26, %s27
      %p31 = pneg %p25
      %p32 = scmp.eq.s32.totalorder %s16, 1
      %p33 = por %p31, %p32
      %p34 = scmp.ne.s32.totalorder %s26, %s29
      %p35 = scmp.eq.s32.totalorder %s16, 0
      %p36 = por %p34, %p35
      %p37 = scmp.ne.s32.totalorder %s26, %s29
      %p38 = scmp.eq.s32.totalorder %s21, 1
      %p39 = por %p37, %p38
      %p40 = scmp.ne.s32.totalorder %s29, %s30
      %p41 = scmp.eq.s32.totalorder %s21, 0
      %p42 = por %p40, %p41
      %p43 = scmp.ne.s32.totalorder %s29, %s30
      %p44 = scmp.eq.s32.totalorder %s22, 1
      %p45 = por %p43, %p44
      %p47 = scmp.ne.s32.totalorder %s30, %s46
      %p48 = scmp.eq.s32.totalorder %s22, 0
      %p49 = por %p47, %p48
      %s50 = ssub.s32 %s16, %s23
      %p51 = scmp.eq.s32.totalorder %s50, 0
      %s53 = sadd.s32 %s52, 1
      %s54 = scalar_select %p51, %s52, %s53
      %p57 = pneg %p51
      %p58 = scmp.eq.s32.totalorder %s16, 1
      %p59 = por %p57, %p58
      %p60 = scmp.ne.s32.totalorder %s52, %s55
      %p61 = scmp.eq.s32.totalorder %s16, 0
      %p62 = por %p60, %p61
      %p63 = scmp.ne.s32.totalorder %s52, %s55
      %p64 = scmp.eq.s32.totalorder %s21, 1
      %p65 = por %p63, %p64
      %p66 = scmp.ne.s32.totalorder %s55, %s56
      %p67 = scmp.eq.s32.totalorder %s21, 0
      %p68 = por %p66, %p67
      %p69 = scmp.ne.s32.totalorder %s55, %s56
      %p70 = scmp.eq.s32.totalorder %s22, 1
      %p71 = por %p69, %p70
      %p73 = scmp.ne.s32.totalorder %s56, %s72
      %p74 = scmp.eq.s32.totalorder %s22, 0
      %p75 = por %p73, %p74
      %s76 = ssub.s32 %s16, %s23
      %p77 = scmp.eq.s32.totalorder %s76, 0
      %s79 = sadd.s32 %s78, 1
      %s80 = scalar_select %p77, %s78, %s79
      %p83 = pneg %p77
      %p84 = scmp.eq.s32.totalorder %s16, 1
      %p85 = por %p83, %p84
      %p86 = scmp.ne.s32.totalorder %s78, %s81
      %p87 = scmp.eq.s32.totalorder %s16, 0
      %p88 = por %p86, %p87
      %p89 = scmp.ne.s32.totalorder %s78, %s81
      %p90 = scmp.eq.s32.totalorder %s21, 1
      %p91 = por %p89, %p90
      %p92 = scmp.ne.s32.totalorder %s81, %s82
      %p93 = scmp.eq.s32.totalorder %s21, 0
      %p94 = por %p92, %p93
      %p95 = scmp.ne.s32.totalorder %s81, %s82
      %p96 = scmp.eq.s32.totalorder %s22, 1
      %p97 = por %p95, %p96
      %p99 = scmp.ne.s32.totalorder %s82, %s98
      %p100 = scmp.eq.s32.totalorder %s22, 0
      %p101 = por %p99, %p100
      %s102 = ssub.s32 %s16, %s23
      %p103 = scmp.eq.s32.totalorder %s102, 0
      %s105 = sadd.s32 %s104, 1
      %s106 = scalar_select %p103, %s104, %s105
      %p109 = pneg %p103
      %p110 = scmp.eq.s32.totalorder %s16, 1
      %p111 = por %p109, %p110
      %p112 = scmp.ne.s32.totalorder %s104, %s107
      %p113 = scmp.eq.s32.totalorder %s16, 0
      %p114 = por %p112, %p113
      %p115 = scmp.ne.s32.totalorder %s104, %s107
      %p116 = scmp.eq.s32.totalorder %s21, 1
      %p117 = por %p115, %p116
      %p118 = scmp.ne.s32.totalorder %s107, %s108
      %p119 = scmp.eq.s32.totalorder %s21, 0
      %p120 = por %p118, %p119
      %p121 = scmp.ne.s32.totalorder %s107, %s108
      %p122 = scmp.eq.s32.totalorder %s22, 1
      %p123 = por %p121, %p122
      %p125 = scmp.ne.s32.totalorder %s108, %s124
      %p126 = scmp.eq.s32.totalorder %s22, 0
      %p127 = por %p125, %p126
      %s128 = ssub.s32 %s16, %s23
      %p129 = scmp.eq.s32.totalorder %s128, 0
      %s131 = sadd.s32 %s130, 1
      %s132 = scalar_select %p129, %s130, %s131
      %p135 = pneg %p129
      %p136 = scmp.eq.s32.totalorder %s16, 1
      %p137 = por %p135, %p136
      %p138 = scmp.ne.s32.totalorder %s130, %s133
      %p139 = scmp.eq.s32.totalorder %s16, 0
      %p140 = por %p138, %p139
      %p141 = scmp.ne.s32.totalorder %s130, %s133
      %p142 = scmp.eq.s32.totalorder %s21, 1
      %p143 = por %p141, %p142
      %p144 = scmp.ne.s32.totalorder %s133, %s134
      %p145 = scmp.eq.s32.totalorder %s21, 0
      %p146 = por %p144, %p145
      %p147 = scmp.ne.s32.totalorder %s133, %s134
      %p148 = scmp.eq.s32.totalorder %s22, 1
      %p149 = por %p147, %p148
      %p151 = scmp.ne.s32.totalorder %s134, %s150
      %p152 = scmp.eq.s32.totalorder %s22, 0
      %p153 = por %p151, %p152
      %s154 = ssub.s32 %s16, %s23
      %p155 = scmp.eq.s32.totalorder %s154, 0
      %s157 = sadd.s32 %s156, 1
      %s158 = scalar_select %p155, %s156, %s157
      %p161 = pneg %p155
      %p162 = scmp.eq.s32.totalorder %s16, 1
      %p163 = por %p161, %p162
      %p164 = scmp.ne.s32.totalorder %s156, %s159
      %p165 = scmp.eq.s32.totalorder %s16, 0
      %p166 = por %p164, %p165
      %p167 = scmp.ne.s32.totalorder %s156, %s159
      %p168 = scmp.eq.s32.totalorder %s21, 1
      %p169 = por %p167, %p168
      %p170 = scmp.ne.s32.totalorder %s159, %s160
      %p171 = scmp.eq.s32.totalorder %s21, 0
      %p172 = por %p170, %p171
      %p173 = scmp.ne.s32.totalorder %s159, %s160
      %p174 = scmp.eq.s32.totalorder %s22, 1
      %p175 = por %p173, %p174
      %p177 = scmp.ne.s32.totalorder %s160, %s176
      %p178 = scmp.eq.s32.totalorder %s22, 0
      %p179 = por %p177, %p178
      %s180 = ssub.s32 %s16, %s23
      %p181 = scmp.eq.s32.totalorder %s180, 0
      %s183 = sadd.s32 %s182, 1
      %s184 = scalar_select %p181, %s182, %s183
      %p187 = pneg %p181
      %p188 = scmp.eq.s32.totalorder %s16, 1
      %p189 = por %p187, %p188
      %p190 = scmp.ne.s32.totalorder %s182, %s185
      %p191 = scmp.eq.s32.totalorder %s16, 0
      %p192 = por %p190, %p191
      %p193 = scmp.ne.s32.totalorder %s182, %s185
      %p194 = scmp.eq.s32.totalorder %s21, 1
      %p195 = por %p193, %p194
      %p196 = scmp.ne.s32.totalorder %s185, %s186
      %p197 = scmp.eq.s32.totalorder %s21, 0
      %p198 = por %p196, %p197
      %p199 = scmp.ne.s32.totalorder %s185, %s186
      %p200 = scmp.eq.s32.totalorder %s22, 1
      %p201 = por %p199, %p200
      %p203 = scmp.ne.s32.totalorder %s186, %s202
      %p204 = scmp.eq.s32.totalorder %s22, 0
      %p205 = por %p203, %p204
      %s207 = sadd.s32 %s206, 1
      %p210 = scmp.eq.s32.totalorder %s16, 1
      %p211 = scmp.ne.s32.totalorder %s206, %s208
      %p212 = scmp.eq.s32.totalorder %s16, 0
      %p213 = por %p211, %p212
      %p214 = scmp.ne.s32.totalorder %s206, %s208
      %p215 = scmp.eq.s32.totalorder %s21, 1
      %p216 = por %p214, %p215
      %p217 = scmp.ne.s32.totalorder %s208, %s209
      %p218 = scmp.eq.s32.totalorder %s21, 0
      %p219 = por %p217, %p218
      %p220 = scmp.ne.s32.totalorder %s208, %s209
      %p221 = scmp.eq.s32.totalorder %s22, 1
      %p222 = por %p220, %p221
      %p224 = scmp.ne.s32.totalorder %s209, %s223
      %p225 = scmp.eq.s32.totalorder %s22, 0
      %p226 = por %p224, %p225
      %s228 = sadd.s32 %s227, 1
      %p231 = scmp.eq.s32.totalorder %s16, 1
      %p232 = scmp.ne.s32.totalorder %s227, %s229
      %p233 = scmp.eq.s32.totalorder %s16, 0
      %p234 = por %p232, %p233
      %p235 = scmp.ne.s32.totalorder %s227, %s229
      %p236 = scmp.eq.s32.totalorder %s21, 1
      %p237 = por %p235, %p236
      %p238 = scmp.ne.s32.totalorder %s229, %s230
      %p239 = scmp.eq.s32.totalorder %s21, 0
      %p240 = por %p238, %p239
      %p241 = scmp.ne.s32.totalorder %s229, %s230
      %p242 = scmp.eq.s32.totalorder %s22, 1
      %p243 = por %p241, %p242
      %p245 = scmp.ne.s32.totalorder %s230, %s244
      %p246 = scmp.eq.s32.totalorder %s22, 0
      %p247 = por %p245, %p246
      %s248 = ssub.s32 %s16, %s23
      %p249 = scmp.eq.s32.totalorder %s248, 0
      %s251 = sadd.s32 %s250, 1
      %s252 = scalar_select %p249, %s250, %s251
      %p255 = pneg %p249
      %p256 = scmp.eq.s32.totalorder %s16, 1
      %p257 = por %p255, %p256
      %p258 = scmp.ne.s32.totalorder %s250, %s253
      %p259 = scmp.eq.s32.totalorder %s16, 0
      %p260 = por %p258, %p259
      %p261 = scmp.ne.s32.totalorder %s250, %s253
      %p262 = scmp.eq.s32.totalorder %s21, 1
      %p263 = por %p261, %p262
      %p264 = scmp.ne.s32.totalorder %s253, %s254
      %p265 = scmp.eq.s32.totalorder %s21, 0
      %p266 = por %p264, %p265
      %p267 = scmp.ne.s32.totalorder %s253, %s254
      %p268 = scmp.eq.s32.totalorder %s22, 1
      %p269 = por %p267, %p268
      %p271 = scmp.ne.s32.totalorder %s254, %s270
      %p272 = scmp.eq.s32.totalorder %s22, 0
      %p273 = por %p271, %p272
      %p274 = scmp.le.s32.totalorder 1, %s16
      %p275 = scmp.lt.s32.totalorder %s16, 3
      %p276 = pnand %p274, %p275
      %p277 = pneg %p276
      // Predicated region
      $region9: #{forward.3} parent=5 // pred_check
        _
      $region10: #{forward.3} parent=5 // pred_check_branch
        %279 = sbr.rel (%p276) target = $region12
      $region11: #{forward.3} parent=5 // pred_region
        %s280 = ssub.s32 %s16, 1
        // Predicated region
        $region13: #{forward.3} parent=11 // pred_check
          %p281 = pneg %p219
        $region14: #{forward.3} parent=11 // pred_check_branch
          %283 = sbr.rel (%p281) target = $region16
        $region15: #{forward.3} parent=11 // pred_region
          %285 = vsyncadd [#allocation3], 0
          %s286 = sshll.u32 %s7, 4
          %s287 = int_to_ptr.hbm [resolvable:$true] %s286
          %s288 = sshll.u32 [#allocation2], 4
          %s289 = int_to_ptr.vmem [resolvable:$true] %s288
          %294 = dma.hbm_to_vmem [thread:$0]  %s287, 4096, %s289, [#allocation3], 256, 256, 16
        $region16: #{forward.3} parent=11 // pred_fallthru
          _
        // Predicated region
        $region17: #{forward.3} parent=11 // pred_check
          %p295 = pneg %p240
        $region18: #{forward.3} parent=11 // pred_check_branch
          %297 = sbr.rel (%p295) target = $region20
        $region19: #{forward.3} parent=11 // pred_region
          _
        $region20: #{forward.3} parent=11 // pred_fallthru
          _
      $region12: #{forward.3} parent=5 // pred_fallthru
        _
      %p298 = scmp.lt.s32.totalorder %s16, 2
      // Predicated region
      $region21: #{forward.3} parent=5 // pred_check
        %p299 = pneg %p298
      $region22: #{forward.3} parent=5 // pred_check_branch
        %301 = sbr.rel (%p299) target = $region24
      $region23: #{forward.3} parent=5 // pred_region
        // Predicated region
        $region25: #{forward.3} parent=23 // pred_check
          %p302 = pneg %p36
        $region26: #{forward.3} parent=23 // pred_check_branch
          %304 = sbr.rel (%p302) target = $region28
        $region27: #{forward.3} parent=23 // pred_region
          %p305 = scmp.lt.s32.totalorder %s16, 1
          %s306 = scalar_select %p305, %s16, 1
          %s307 = smul.addr %s306, 4
          %s308 = smul.addr %s307, 8
          %s309 = scalar_lea.vmem %s0, %s308
        $region28: #{forward.3} parent=23 // pred_fallthru
          _
        // Predicated region
        $region29: #{forward.3} parent=23 // pred_check
          %p310 = pneg %p62
        $region30: #{forward.3} parent=23 // pred_check_branch
          %312 = sbr.rel (%p310) target = $region32
        $region31: #{forward.3} parent=23 // pred_region
          %p313 = scmp.lt.s32.totalorder %s16, 1
          %s314 = scalar_select %p313, %s16, 1
          %s315 = smul.addr %s314, 16
          %s316 = smul.addr %s315, 8
          %s317 = scalar_lea.vmem %s1, %s316
        $region32: #{forward.3} parent=23 // pred_fallthru
          _
        // Predicated region
        $region33: #{forward.3} parent=23 // pred_check
          %p318 = pneg %p88
        $region34: #{forward.3} parent=23 // pred_check_branch
          %320 = sbr.rel (%p318) target = $region36
        $region35: #{forward.3} parent=23 // pred_region
          %p321 = scmp.lt.s32.totalorder %s16, 1
          %s322 = scalar_select %p321, %s16, 1
          %s323 = scalar_lea.vmem %s2, %s322
        $region36: #{forward.3} parent=23 // pred_fallthru
          _
        // Predicated region
        $region37: #{forward.3} parent=23 // pred_check
          %p324 = pneg %p114
        $region38: #{forward.3} parent=23 // pred_check_branch
          %326 = sbr.rel (%p324) target = $region40
        $region39: #{forward.3} parent=23 // pred_region
          %p327 = scmp.lt.s32.totalorder %s16, 1
          %s328 = scalar_select %p327, %s16, 1
          %s329 = smul.addr %s328, 2
          %s330 = smul.addr %s329, 8
          %s331 = scalar_lea.vmem %s3, %s330
        $region40: #{forward.3} parent=23 // pred_fallthru
          _
        // Predicated region
        $region41: #{forward.3} parent=23 // pred_check
          %p332 = pneg %p140
        $region42: #{forward.3} parent=23 // pred_check_branch
          %334 = sbr.rel (%p332) target = $region44
        $region43: #{forward.3} parent=23 // pred_region
          %p335 = scmp.lt.s32.totalorder %s16, 1
          %s336 = scalar_select %p335, %s16, 1
          %s337 = smul.addr %s336, 2
          %s338 = smul.addr %s337, 8
          %s339 = scalar_lea.vmem %s4, %s338
        $region44: #{forward.3} parent=23 // pred_fallthru
          _
        // Predicated region
        $region45: #{forward.3} parent=23 // pred_check
          %p340 = pneg %p166
        $region46: #{forward.3} parent=23 // pred_check_branch
          %342 = sbr.rel (%p340) target = $region48
        $region47: #{forward.3} parent=23 // pred_region
          %p343 = scmp.lt.s32.totalorder %s16, 1
          %s344 = scalar_select %p343, %s16, 1
          %s345 = smul.addr %s344, 64
          %s346 = smul.addr %s345, 8
          %s347 = scalar_lea.vmem %s5, %s346
        $region48: #{forward.3} parent=23 // pred_fallthru
          _
        // Predicated region
        $region49: #{forward.3} parent=23 // pred_check
          %p348 = pneg %p192
        $region50: #{forward.3} parent=23 // pred_check_branch
          %350 = sbr.rel (%p348) target = $region52
        $region51: #{forward.3} parent=23 // pred_region
          %p351 = scmp.lt.s32.totalorder %s16, 1
          %s352 = scalar_select %p351, %s16, 1
          %s353 = scalar_lea.vmem %s6, %s352
        $region52: #{forward.3} parent=23 // pred_fallthru
          _
      $region24: #{forward.3} parent=5 // pred_fallthru
        _
      %p354 = scmp.le.s32.totalorder 1, %s16
      %p355 = scmp.lt.s32.totalorder %s16, 3
      %p356 = pnand %p354, %p355
      %p357 = pneg %p356
      // Predicated region
      $region53: #{forward.3} parent=5 // pred_check
        _
      $region54: #{forward.3} parent=5 // pred_check_branch
        %359 = sbr.rel (%p356) target = $region56
      $region55: #{forward.3} parent=5 // pred_region
        %s360 = ssub.s32 %s16, 1
        // Predicated region
        $region57: #{forward.3} parent=55 // pred_check
          %p361 = pneg %p219
        $region58: #{forward.3} parent=55 // pred_check_branch
          %363 = sbr.rel (%p361) target = $region60
        $region59: #{forward.3} parent=55 // pred_region
          %365 = dma.done [#allocation3], 4096
        $region60: #{forward.3} parent=55 // pred_fallthru
          _
        %p366 = scmp.lt.s32.totalorder %s21, 1
        %s367 = scalar_select %p366, %s21, 1
        %s368 = smul.addr %s367, 4
        %s369 = smul.addr %s368, 8
        %s370 = scalar_lea.vmem %s0, %s369
        %p371 = pneg %p42
        %p372 = pneg %p39
        %p373 = scmp.lt.s32.totalorder %s21, 1
        %s374 = scalar_select %p373, %s21, 1
        %s375 = smul.addr %s374, 16
        %s376 = smul.addr %s375, 8
        %s377 = scalar_lea.vmem %s1, %s376
        %p378 = pneg %p68
        %p379 = pneg %p65
        %p380 = scmp.lt.s32.totalorder %s21, 1
        %s381 = scalar_select %p380, %s21, 1
        %s382 = scalar_lea.vmem %s2, %s381
        %p383 = pneg %p94
        %p384 = pneg %p91
        %p385 = scmp.lt.s32.totalorder %s21, 1
        %s386 = scalar_select %p385, %s21, 1
        %s387 = smul.addr %s386, 2
        %s388 = smul.addr %s387, 8
        %s389 = scalar_lea.vmem %s3, %s388
        %p390 = pneg %p120
        %p391 = pneg %p117
        %p392 = scmp.lt.s32.totalorder %s21, 1
        %s393 = scalar_select %p392, %s21, 1
        %s394 = smul.addr %s393, 2
        %s395 = smul.addr %s394, 8
        %s396 = scalar_lea.vmem %s4, %s395
        %p397 = pneg %p146
        %p398 = pneg %p143
        %p399 = scmp.lt.s32.totalorder %s21, 1
        %s400 = scalar_select %p399, %s21, 1
        %s401 = smul.addr %s400, 64
        %s402 = smul.addr %s401, 8
        %s403 = scalar_lea.vmem %s5, %s402
        %p404 = pneg %p172
        %p405 = pneg %p169
        %p406 = scmp.lt.s32.totalorder %s21, 1
        %s407 = scalar_select %p406, %s21, 1
        %s408 = scalar_lea.vmem %s6, %s407
        %p409 = pneg %p198
        %p410 = pneg %p195
        %p411 = pneg %p219
        %p412 = pneg %p216
        %p413 = pneg %p240
        %p414 = pneg %p237
        %p415 = pneg %p266
        %p416 = pneg %p263
        %p417 = scmp.lt.s32.totalorder %s21, 1
        %s418 = scalar_select %p417, %s21, 1
        %s419 = smul.addr %s418, 4
        %s420 = smul.addr %s419, 4
        %s421 = scalar_lea.vmem %s9, %s420
        %p422 = scmp.lt.s32.totalorder %s21, 1
        %s423 = scalar_select %p422, %s21, 1
        %s424 = smul.addr %s423, 4
        %s425 = smul.addr %s424, 8
        %s426 = scalar_lea.vmem %s0, %s425
        %p427 = scmp.lt.s32.totalorder %s21, 1
        %s428 = scalar_select %p427, %s21, 1
        %s429 = smul.addr %s428, 16
        %s430 = smul.addr %s429, 8
        %s431 = scalar_lea.vmem %s1, %s430
        %p432 = scmp.lt.s32.totalorder %s21, 1
        %s433 = scalar_select %p432, %s21, 1
        %s434 = scalar_lea.vmem %s2, %s433
        %p435 = scmp.lt.s32.totalorder %s21, 1
        %s436 = scalar_select %p435, %s21, 1
        %s437 = smul.addr %s436, 2
        %s438 = smul.addr %s437, 8
        %s439 = scalar_lea.vmem %s3, %s438
        %p440 = scmp.lt.s32.totalorder %s21, 1
        %s441 = scalar_select %p440, %s21, 1
        %s442 = smul.addr %s441, 2
        %s443 = smul.addr %s442, 8
        %s444 = scalar_lea.vmem %s4, %s443
        %p445 = scmp.lt.s32.totalorder %s21, 1
        %s446 = scalar_select %p445, %s21, 1
        %s447 = smul.addr %s446, 64
        %s448 = smul.addr %s447, 8
        %s449 = scalar_lea.vmem %s5, %s448
        %p450 = scmp.lt.s32.totalorder %s21, 1
        %s451 = scalar_select %p450, %s21, 1
        %s452 = scalar_lea.vmem %s6, %s451
        %p453 = scmp.lt.s32.totalorder %s21, 1
        %s454 = scalar_select %p453, %s21, 1
        %s455 = smul.addr %s454, 4
        %s456 = smul.addr %s455, 4
        %s457 = scalar_lea.vmem %s9, %s456
        %v458 = vld [vmem:[%s431] sm:$0xff]
        %v459 = vld [vmem:[%s431 + $0x8] sm:$0xff]
        %v460 = vld [vmem:[%s431 + $0x10] sm:$0xff]
        %v461 = vld [vmem:[%s431 + $0x18] sm:$0xff]
        %v462 = vld [vmem:[%s431 + $0x20] sm:$0xff]
        %v463 = vld [vmem:[%s431 + $0x28] sm:$0xff]
        %v464 = vld [vmem:[%s431 + $0x30] sm:$0xff]
        %v465 = vld [vmem:[%s431 + $0x38] sm:$0xff]
        %v466 = vld [vmem:[%s431 + $0x40] sm:$0xff]
        %v467 = vld [vmem:[%s431 + $0x48] sm:$0xff]
        %v468 = vld [vmem:[%s431 + $0x50] sm:$0xff]
        %v469 = vld [vmem:[%s431 + $0x58] sm:$0xff]
        %v470 = vld [vmem:[%s431 + $0x60] sm:$0xff]
        %v471 = vld [vmem:[%s431 + $0x68] sm:$0xff]
        %v472 = vld [vmem:[%s431 + $0x70] sm:$0xff]
        %v473 = vld [vmem:[%s431 + $0x78] sm:$0xff]
        %v474 = vld [vmem:[%s434] sm:$0x1]
        %v475 = vld [vmem:[%s439] sm:$0xff]
        %v476 = vld [vmem:[%s439 + $0x8] sm:$0x7]
        %v477 = vld [vmem:[%s444] sm:$0xff]
        %v478 = vld [vmem:[%s444 + $0x8] sm:$0x7]
        %v479 = vld [vmem:[%s452] sm:$0x1]
        %v480 = vld [vmem:[#allocation2] sm:$0xff]
        %v481 = vld [vmem:[#allocation2 + $0x8] sm:$0xff]
        %v482 = vld [vmem:[#allocation2 + $0x10] sm:$0xff]
        %v483 = vld [vmem:[#allocation2 + $0x18] sm:$0xff]
        %v484 = vld [vmem:[#allocation2 + $0x20] sm:$0xff]
        %v485 = vld [vmem:[#allocation2 + $0x28] sm:$0xff]
        %v486 = vld [vmem:[#allocation2 + $0x30] sm:$0xff]
        %v487 = vld [vmem:[#allocation2 + $0x38] sm:$0xff]
        %v488 = vld [vmem:[#allocation2 + $0x40] sm:$0xff]
        %v489 = vld [vmem:[#allocation2 + $0x48] sm:$0xff]
        %v490 = vld [vmem:[#allocation2 + $0x50] sm:$0xff]
        %v491 = vld [vmem:[#allocation2 + $0x58] sm:$0xff]
        %v492 = vld [vmem:[#allocation2 + $0x60] sm:$0xff]
        %v493 = vld [vmem:[#allocation2 + $0x68] sm:$0xff]
        %v494 = vld [vmem:[#allocation2 + $0x70] sm:$0xff]
        %v495 = vld [vmem:[#allocation2 + $0x78] sm:$0xff]
        %v496 = vld [vmem:[#allocation2 + $0x80] sm:$0xff]
        %v497 = vld [vmem:[#allocation2 + $0x88] sm:$0xff]
        %v498 = vld [vmem:[#allocation2 + $0x90] sm:$0xff]
        %v499 = vld [vmem:[#allocation2 + $0x98] sm:$0xff]
        %v500 = vld [vmem:[#allocation2 + $0xa0] sm:$0xff]
        %v501 = vld [vmem:[#allocation2 + $0xa8] sm:$0xff]
        %v502 = vld [vmem:[#allocation2 + $0xb0] sm:$0xff]
        %v503 = vld [vmem:[#allocation2 + $0xb8] sm:$0xff]
        %v504 = vld [vmem:[#allocation2 + $0xc0] sm:$0xff]
        %v505 = vld [vmem:[#allocation2 + $0xc8] sm:$0xff]
        %v506 = vld [vmem:[#allocation2 + $0xd0] sm:$0xff]
        %v507 = vld [vmem:[#allocation2 + $0xd8] sm:$0xff]
        %v508 = vld [vmem:[#allocation2 + $0xe0] sm:$0xff]
        %v509 = vld [vmem:[#allocation2 + $0xe8] sm:$0xff]
        %v510 = vld [vmem:[#allocation2 + $0xf0] sm:$0xff]
        %v511 = vld [vmem:[#allocation2 + $0xf8] sm:$0xff]
        %v512 = vld [vmem:[%s8] sm:$0x3]
        %v513 = vld [vmem:[%s426] sm:$0xff]
        %v514 = vld [vmem:[%s426 + $0x8] sm:$0x7]
        %v516 = vperm.slane %v474, 0
        %518 = vmatpush.msra.mxu0 %v473
        %519 = vmatpush.msra.mxu0 %v472
        %520 = vmatpush.msra.mxu0 %v471
        %521 = vmatpush.msra.mxu0 %v470
        %522 = vmatpush.msra.mxu0 %v469
        %523 = vmatpush.msra.mxu0 %v468
        %524 = vmatpush.msra.mxu0 %v467
        %525 = vmatpush.msra.mxu0 %v466
        %526 = vmatpush.msra.mxu0 %v465
        %527 = vmatpush.msra.mxu0 %v464
        %528 = vmatpush.msra.mxu0 %v463
        %529 = vmatpush.msra.mxu0 %v462
        %530 = vmatpush.msra.mxu0 %v461
        %531 = vmatpush.msra.mxu0 %v460
        %532 = vmatpush.msra.mxu0 %v459
        %533 = vmatpush.msra.mxu0 %v458
        %534 = vmatmul.f32.gmra.mxu0 %v513
        %v535 = vpop.f32.mrf.mxu0
        %v536 = vadd.f32 %v516, %v535
        %537 = vmatmul.f32.gmra.mxu0 %v514
        %v538 = vpop.f32.mrf.mxu0
        %v539 = vadd.f32 %v516, %v538
        %540 = vdwg.mxu0
        %vm541 = vcmp.gt.f32.partialorder %v536, 0.0
        %vm542 = vcmp.gt.f32.partialorder %v539, 0.0
        %v543 = vmul.f32 %v536, 0.01
        %v544 = vmul.f32 %v539, 0.01
        %v545 = vsel %vm541, %v536, %v543
        %v546 = vsel %vm542, %v539, %v544
        %vm547 = vcmask 523264
        %v548 = vsel %vm547, %v545, 0.0
        %vm549 = vcmask 518144
        %v550 = vsel %vm549, %v546, 0.0
        %v551 = vadd.f32 %v548, %v550
        %552 = vadd.xlane.f32.xlu0 %v551
        %v553 = vpop.xlane.xlu0 %552
        %v554 = vrot.slane %v553, 4
        %v555 = vadd.f32 %v553, %v554
        %v556 = vrot.slane %v555, 2
        %v557 = vadd.f32 %v555, %v556
        %v558 = vrot.slane %v557, 1
        %v559 = vadd.f32 %v557, %v558
        %s560 = vtos %v559
        %v561 = vrcp.pop 704.0
        %v562 = vmul.f32 704.0, %v561
        %v563 = vsub.f32 1.0, %v562
        %v564 = vmul.f32 %v561, %v563
        %v565 = vadd.f32 %v561, %v564
        %vm566 = vweird.f32 %v561
        %v567 = vsel %vm566, %v561, %v565
        %s568 = vtos %v567
        %s569 = smul.f32 %s560, %s568
        %v570 = vstv %s569
        %v571 = vsub.f32 %v545, %v570
        %v572 = vsub.f32 %v546, %v570
        %v573 = vmul.f32 %v571, %v571
        %v574 = vmul.f32 %v572, %v572
        %v575 = vsel %vm547, %v573, 0.0
        %v576 = vsel %vm549, %v574, 0.0
        %v577 = vadd.f32 %v575, %v576
        %578 = vadd.xlane.f32.xlu0 %v577
        %v579 = vpop.xlane.xlu0 %578
        %v580 = vrot.slane %v579, 4
        %v581 = vadd.f32 %v579, %v580
        %v582 = vrot.slane %v581, 2
        %v583 = vadd.f32 %v581, %v582
        %v584 = vrot.slane %v583, 1
        %v585 = vadd.f32 %v583, %v584
        %s586 = vtos %v585
        %v587 = vrcp.pop 704.0
        %v588 = vmul.f32 704.0, %v587
        %v589 = vsub.f32 1.0, %v588
        %v590 = vmul.f32 %v587, %v589
        %v591 = vadd.f32 %v587, %v590
        %vm592 = vweird.f32 %v587
        %v593 = vsel %vm592, %v587, %v591
        %s594 = vtos %v593
        %s595 = smul.f32 %s586, %s594
        %s596 = sadd.f32 %s595, 1e-05
        %v597 = vstv %s596
        %v598 = vrsqrt.pop %v597
        %v599 = vmul.f32 %v598, %v597
        %v600 = vmul.f32 %v599, %v598
        %v601 = vmul.f32 0.5, %v600
        %v602 = vsub.f32 1.5, %v601
        %v603 = vmul.f32 %v598, %v602
        %vm604 = vweird.f32 %v597
        %vm605 = vweird.f32 %v598
        %vm606 = vmor %vm604, %vm605
        %v607 = vsel %vm606, %v598, %v603
        %s608 = vtos %v607
        %v609 = vstv %s608
        %v610 = vmul.f32 %v571, %v609
        %v611 = vmul.f32 %v572, %v609
        %v612 = vmul.f32 %v610, %v475
        %v613 = vmul.f32 %v611, %v476
        %v614 = vadd.f32 %v612, %v477
        %v615 = vadd.f32 %v613, %v478
        %v616 = vld [vmem:[%s449] sm:$0xff]
        %v617 = vld [vmem:[%s449 + $0x8] sm:$0xff]
        %v618 = vld [vmem:[%s449 + $0x10] sm:$0xff]
        %v619 = vld [vmem:[%s449 + $0x18] sm:$0xff]
        %v620 = vld [vmem:[%s449 + $0x20] sm:$0xff]
        %v621 = vld [vmem:[%s449 + $0x28] sm:$0xff]
        %v622 = vld [vmem:[%s449 + $0x30] sm:$0xff]
        %v623 = vld [vmem:[%s449 + $0x38] sm:$0xff]
        %s624 = scalar_lea.vmem %s449, 64
        %v625 = vld [vmem:[%s624] sm:$0xff]
        %v626 = vld [vmem:[%s624 + $0x8] sm:$0xff]
        %v627 = vld [vmem:[%s624 + $0x10] sm:$0xff]
        %v628 = vld [vmem:[%s624 + $0x18] sm:$0xff]
        %v629 = vld [vmem:[%s624 + $0x20] sm:$0xff]
        %v630 = vld [vmem:[%s624 + $0x28] sm:$0xff]
        %v631 = vld [vmem:[%s624 + $0x30] sm:$0xff]
        %v632 = vld [vmem:[%s624 + $0x38] sm:$0xff]
        %v634 = vrot.slane %v614, 1
        %v635 = vsel %vm547, %v634, 0
        %637 = vmatpush.msra.mxu0 0.0
        %638 = vmatpush.msra.mxu0 0.0
        %639 = vmatpush.msra.mxu0 0.0
        %640 = vmatpush.msra.mxu0 0.0
        %641 = vmatpush.msra.mxu0 0.0
        %642 = vmatpush.msra.mxu0 0.0
        %643 = vmatpush.msra.mxu0 0.0
        %644 = vmatpush.msra.mxu0 0.0
        %645 = vmatpush.msra.mxu0 %v632
        %646 = vmatpush.msra.mxu0 %v631
        %647 = vmatpush.msra.mxu0 %v630
        %648 = vmatpush.msra.mxu0 %v629
        %649 = vmatpush.msra.mxu0 %v628
        %650 = vmatpush.msra.mxu0 %v627
        %651 = vmatpush.msra.mxu0 %v626
        %652 = vmatpush.msra.mxu0 %v625
        %653 = vmatmul.f32.gmra.mxu0 %v635
        %v654 = vpop.f32.mrf.mxu0
        %v655 = vadd.f32 0.0, %v654
        %656 = vdwg.mxu0
        %v657 = vsel %vm547, %v614, 0
        %659 = vmatpush.msra.mxu0 0.0
        %660 = vmatpush.msra.mxu0 0.0
        %661 = vmatpush.msra.mxu0 0.0
        %662 = vmatpush.msra.mxu0 0.0
        %663 = vmatpush.msra.mxu0 0.0
        %664 = vmatpush.msra.mxu0 0.0
        %665 = vmatpush.msra.mxu0 0.0
        %666 = vmatpush.msra.mxu0 0.0
        %667 = vmatpush.msra.mxu0 %v623
        %668 = vmatpush.msra.mxu0 %v622
        %669 = vmatpush.msra.mxu0 %v621
        %670 = vmatpush.msra.mxu0 %v620
        %671 = vmatpush.msra.mxu0 %v619
        %672 = vmatpush.msra.mxu0 %v618
        %673 = vmatpush.msra.mxu0 %v617
        %674 = vmatpush.msra.mxu0 %v616
        %675 = vmatmul.f32.gmra.mxu0 %v657
        %v676 = vpop.f32.mrf.mxu0
        %v677 = vadd.f32 %v655, %v676
        %678 = vdwg.mxu0
        %s679 = scalar_lea.vmem %s449, 128
        %v680 = vld [vmem:[%s679] sm:$0xff]
        %v681 = vld [vmem:[%s679 + $0x8] sm:$0xff]
        %v682 = vld [vmem:[%s679 + $0x10] sm:$0xff]
        %v683 = vld [vmem:[%s679 + $0x18] sm:$0xff]
        %v684 = vld [vmem:[%s679 + $0x20] sm:$0xff]
        %v685 = vld [vmem:[%s679 + $0x28] sm:$0xff]
        %v686 = vld [vmem:[%s679 + $0x30] sm:$0xff]
        %v687 = vld [vmem:[%s679 + $0x38] sm:$0xff]
        %v688 = vrot.slane %v614, 2
        %v689 = vsel %vm547, %v688, 0
        %691 = vmatpush.msra.mxu0 0.0
        %692 = vmatpush.msra.mxu0 0.0
        %693 = vmatpush.msra.mxu0 0.0
        %694 = vmatpush.msra.mxu0 0.0
        %695 = vmatpush.msra.mxu0 0.0
        %696 = vmatpush.msra.mxu0 0.0
        %697 = vmatpush.msra.mxu0 0.0
        %698 = vmatpush.msra.mxu0 0.0
        %699 = vmatpush.msra.mxu0 %v687
        %700 = vmatpush.msra.mxu0 %v686
        %701 = vmatpush.msra.mxu0 %v685
        %702 = vmatpush.msra.mxu0 %v684
        %703 = vmatpush.msra.mxu0 %v683
        %704 = vmatpush.msra.mxu0 %v682
        %705 = vmatpush.msra.mxu0 %v681
        %706 = vmatpush.msra.mxu0 %v680
        %707 = vmatmul.f32.gmra.mxu0 %v689
        %v708 = vpop.f32.mrf.mxu0
        %v709 = vadd.f32 0.0, %v708
        %710 = vdwg.mxu0
        %v711 = vadd.f32 %v677, %v709
        %s712 = scalar_lea.vmem %s449, 192
        %v713 = vld [vmem:[%s712] sm:$0xff]
        %v714 = vld [vmem:[%s712 + $0x8] sm:$0xff]
        %v715 = vld [vmem:[%s712 + $0x10] sm:$0xff]
        %v716 = vld [vmem:[%s712 + $0x18] sm:$0xff]
        %v717 = vld [vmem:[%s712 + $0x20] sm:$0xff]
        %v718 = vld [vmem:[%s712 + $0x28] sm:$0xff]
        %v719 = vld [vmem:[%s712 + $0x30] sm:$0xff]
        %v720 = vld [vmem:[%s712 + $0x38] sm:$0xff]
        %v721 = vrot.slane %v614, 3
        %v722 = vsel %vm547, %v721, 0
        %724 = vmatpush.msra.mxu0 0.0
        %725 = vmatpush.msra.mxu0 0.0
        %726 = vmatpush.msra.mxu0 0.0
        %727 = vmatpush.msra.mxu0 0.0
        %728 = vmatpush.msra.mxu0 0.0
        %729 = vmatpush.msra.mxu0 0.0
        %730 = vmatpush.msra.mxu0 0.0
        %731 = vmatpush.msra.mxu0 0.0
        %732 = vmatpush.msra.mxu0 %v720
        %733 = vmatpush.msra.mxu0 %v719
        %734 = vmatpush.msra.mxu0 %v718
        %735 = vmatpush.msra.mxu0 %v717
        %736 = vmatpush.msra.mxu0 %v716
        %737 = vmatpush.msra.mxu0 %v715
        %738 = vmatpush.msra.mxu0 %v714
        %739 = vmatpush.msra.mxu0 %v713
        %740 = vmatmul.f32.gmra.mxu0 %v722
        %v741 = vpop.f32.mrf.mxu0
        %v742 = vadd.f32 0.0, %v741
        %743 = vdwg.mxu0
        %v744 = vadd.f32 %v711, %v742
        %s745 = scalar_lea.vmem %s449, 256
        %v746 = vld [vmem:[%s745] sm:$0xff]
        %v747 = vld [vmem:[%s745 + $0x8] sm:$0xff]
        %v748 = vld [vmem:[%s745 + $0x10] sm:$0xff]
        %v749 = vld [vmem:[%s745 + $0x18] sm:$0xff]
        %v750 = vld [vmem:[%s745 + $0x20] sm:$0xff]
        %v751 = vld [vmem:[%s745 + $0x28] sm:$0xff]
        %v752 = vld [vmem:[%s745 + $0x30] sm:$0xff]
        %v753 = vld [vmem:[%s745 + $0x38] sm:$0xff]
        %v754 = vrot.slane %v614, 4
        %v755 = vsel %vm547, %v754, 0
        %757 = vmatpush.msra.mxu0 0.0
        %758 = vmatpush.msra.mxu0 0.0
        %759 = vmatpush.msra.mxu0 0.0
        %760 = vmatpush.msra.mxu0 0.0
        %761 = vmatpush.msra.mxu0 0.0
        %762 = vmatpush.msra.mxu0 0.0
        %763 = vmatpush.msra.mxu0 0.0
        %764 = vmatpush.msra.mxu0 0.0
        %765 = vmatpush.msra.mxu0 %v753
        %766 = vmatpush.msra.mxu0 %v752
        %767 = vmatpush.msra.mxu0 %v751
        %768 = vmatpush.msra.mxu0 %v750
        %769 = vmatpush.msra.mxu0 %v749
        %770 = vmatpush.msra.mxu0 %v748
        %771 = vmatpush.msra.mxu0 %v747
        %772 = vmatpush.msra.mxu0 %v746
        %773 = vmatmul.f32.gmra.mxu0 %v755
        %v774 = vpop.f32.mrf.mxu0
        %v775 = vadd.f32 0.0, %v774
        %776 = vdwg.mxu0
        %v777 = vadd.f32 %v744, %v775
        %s778 = scalar_lea.vmem %s449, 320
        %v779 = vld [vmem:[%s778] sm:$0xff]
        %v780 = vld [vmem:[%s778 + $0x8] sm:$0xff]
        %v781 = vld [vmem:[%s778 + $0x10] sm:$0xff]
        %v782 = vld [vmem:[%s778 + $0x18] sm:$0xff]
        %v783 = vld [vmem:[%s778 + $0x20] sm:$0xff]
        %v784 = vld [vmem:[%s778 + $0x28] sm:$0xff]
        %v785 = vld [vmem:[%s778 + $0x30] sm:$0xff]
        %v786 = vld [vmem:[%s778 + $0x38] sm:$0xff]
        %vm788 = vcmask 1042432
        %v789 = vrot.slane %v614, 5
        %v790 = vrot.slane %v615, 5
        %v791 = vsel %vm788, %v789, %v790
        %v792 = vsel %vm547, %v791, 0
        %794 = vmatpush.msra.mxu0 0.0
        %795 = vmatpush.msra.mxu0 0.0
        %796 = vmatpush.msra.mxu0 0.0
        %797 = vmatpush.msra.mxu0 0.0
        %798 = vmatpush.msra.mxu0 0.0
        %799 = vmatpush.msra.mxu0 0.0
        %800 = vmatpush.msra.mxu0 0.0
        %801 = vmatpush.msra.mxu0 0.0
        %802 = vmatpush.msra.mxu0 %v786
        %803 = vmatpush.msra.mxu0 %v785
        %804 = vmatpush.msra.mxu0 %v784
        %805 = vmatpush.msra.mxu0 %v783
        %806 = vmatpush.msra.mxu0 %v782
        %807 = vmatpush.msra.mxu0 %v781
        %808 = vmatpush.msra.mxu0 %v780
        %809 = vmatpush.msra.mxu0 %v779
        %810 = vmatmul.f32.gmra.mxu0 %v792
        %v811 = vpop.f32.mrf.mxu0
        %v812 = vadd.f32 0.0, %v811
        %813 = vdwg.mxu0
        %v814 = vadd.f32 %v777, %v812
        %s815 = scalar_lea.vmem %s449, 384
        %v816 = vld [vmem:[%s815] sm:$0xff]
        %v817 = vld [vmem:[%s815 + $0x8] sm:$0xff]
        %v818 = vld [vmem:[%s815 + $0x10] sm:$0xff]
        %v819 = vld [vmem:[%s815 + $0x18] sm:$0xff]
        %v820 = vld [vmem:[%s815 + $0x20] sm:$0xff]
        %v821 = vld [vmem:[%s815 + $0x28] sm:$0xff]
        %v822 = vld [vmem:[%s815 + $0x30] sm:$0xff]
        %v823 = vld [vmem:[%s815 + $0x38] sm:$0xff]
        %vm824 = vcmask 1041408
        %v825 = vrot.slane %v614, 6
        %v826 = vrot.slane %v615, 6
        %v827 = vsel %vm824, %v825, %v826
        %v828 = vsel %vm547, %v827, 0
        %830 = vmatpush.msra.mxu0 0.0
        %831 = vmatpush.msra.mxu0 0.0
        %832 = vmatpush.msra.mxu0 0.0
        %833 = vmatpush.msra.mxu0 0.0
        %834 = vmatpush.msra.mxu0 0.0
        %835 = vmatpush.msra.mxu0 0.0
        %836 = vmatpush.msra.mxu0 0.0
        %837 = vmatpush.msra.mxu0 0.0
        %838 = vmatpush.msra.mxu0 %v823
        %839 = vmatpush.msra.mxu0 %v822
        %840 = vmatpush.msra.mxu0 %v821
        %841 = vmatpush.msra.mxu0 %v820
        %842 = vmatpush.msra.mxu0 %v819
        %843 = vmatpush.msra.mxu0 %v818
        %844 = vmatpush.msra.mxu0 %v817
        %845 = vmatpush.msra.mxu0 %v816
        %846 = vmatmul.f32.gmra.mxu0 %v828
        %v847 = vpop.f32.mrf.mxu0
        %v848 = vadd.f32 0.0, %v847
        %849 = vdwg.mxu0
        %v850 = vadd.f32 %v814, %v848
        %s851 = scalar_lea.vmem %s449, 448
        %v852 = vld [vmem:[%s851] sm:$0xff]
        %v853 = vld [vmem:[%s851 + $0x8] sm:$0xff]
        %v854 = vld [vmem:[%s851 + $0x10] sm:$0xff]
        %v855 = vld [vmem:[%s851 + $0x18] sm:$0xff]
        %v856 = vld [vmem:[%s851 + $0x20] sm:$0xff]
        %v857 = vld [vmem:[%s851 + $0x28] sm:$0xff]
        %v858 = vld [vmem:[%s851 + $0x30] sm:$0xff]
        %v859 = vld [vmem:[%s851 + $0x38] sm:$0xff]
        %vm860 = vcmask 1040384
        %v861 = vrot.slane %v614, 7
        %v862 = vrot.slane %v615, 7
        %v863 = vsel %vm860, %v861, %v862
        %v864 = vsel %vm547, %v863, 0
        %866 = vmatpush.msra.mxu0 0.0
        %867 = vmatpush.msra.mxu0 0.0
        %868 = vmatpush.msra.mxu0 0.0
        %869 = vmatpush.msra.mxu0 0.0
        %870 = vmatpush.msra.mxu0 0.0
        %871 = vmatpush.msra.mxu0 0.0
        %872 = vmatpush.msra.mxu0 0.0
        %873 = vmatpush.msra.mxu0 0.0
        %874 = vmatpush.msra.mxu0 %v859
        %875 = vmatpush.msra.mxu0 %v858
        %876 = vmatpush.msra.mxu0 %v857
        %877 = vmatpush.msra.mxu0 %v856
        %878 = vmatpush.msra.mxu0 %v855
        %879 = vmatpush.msra.mxu0 %v854
        %880 = vmatpush.msra.mxu0 %v853
        %881 = vmatpush.msra.mxu0 %v852
        %882 = vmatmul.f32.gmra.mxu0 %v864
        %v883 = vpop.f32.mrf.mxu0
        %v884 = vadd.f32 0.0, %v883
        %885 = vdwg.mxu0
        %v886 = vadd.f32 %v850, %v884
        %v888 = vperm.slane %v479, 0
        %v890 = vadd.f32 %v886, %v888
        %vm891 = vcmp.gt.f32.partialorder %v890, 0.0
        %v892 = vmul.f32 %v890, 0.01
        %v893 = vsel %vm891, %v890, %v892
        %v895 = vperm.slane %v512, 0
        %v896 = vperm.slane %v512, 1
        %899 = vmatpush.msra.mxu0 %v510
        %900 = vmatpush.msra.mxu0 %v508
        %901 = vmatpush.msra.mxu0 %v506
        %902 = vmatpush.msra.mxu0 %v504
        %903 = vmatpush.msra.mxu0 %v502
        %904 = vmatpush.msra.mxu0 %v500
        %905 = vmatpush.msra.mxu0 %v498
        %906 = vmatpush.msra.mxu0 %v496
        %907 = vmatpush.msra.mxu0 %v494
        %908 = vmatpush.msra.mxu0 %v492
        %909 = vmatpush.msra.mxu0 %v490
        %910 = vmatpush.msra.mxu0 %v488
        %911 = vmatpush.msra.mxu0 %v486
        %912 = vmatpush.msra.mxu0 %v484
        %913 = vmatpush.msra.mxu0 %v482
        %914 = vmatpush.msra.mxu0 %v480
        %915 = vmatmul.f32.gmra.mxu0 %v893
        %v916 = vpop.f32.mrf.mxu0
        %v917 = vadd.f32 %v895, %v916
        %918 = vdwg.mxu0
        %919 = vmatpush.msra.mxu0 %v511
        %920 = vmatpush.msra.mxu0 %v509
        %921 = vmatpush.msra.mxu0 %v507
        %922 = vmatpush.msra.mxu0 %v505
        %923 = vmatpush.msra.mxu0 %v503
        %924 = vmatpush.msra.mxu0 %v501
        %925 = vmatpush.msra.mxu0 %v499
        %926 = vmatpush.msra.mxu0 %v497
        %927 = vmatpush.msra.mxu0 %v495
        %928 = vmatpush.msra.mxu0 %v493
        %929 = vmatpush.msra.mxu0 %v491
        %930 = vmatpush.msra.mxu0 %v489
        %931 = vmatpush.msra.mxu0 %v487
        %932 = vmatpush.msra.mxu0 %v485
        %933 = vmatpush.msra.mxu0 %v483
        %934 = vmatpush.msra.mxu0 %v481
        %935 = vmatmul.f32.gmra.mxu0 %v893
        %v936 = vpop.f32.mrf.mxu0
        %v937 = vadd.f32 %v896, %v936
        %938 = vdwg.mxu0
        %v941 = vrot.slane %v937, 4
        %vm942 = vcmask 1043456
        %v943 = vsel %vm942, %v917, %v941
        %945 = vst [vmem:[%s457] sm:$0xff] %v943
        %s946 = scalar_lea.vmem %s426, 16
        %v947 = vld [vmem:[%s946] sm:$0xff]
        %v948 = vld [vmem:[%s946 + $0x8] sm:$0x7]
        %949 = vmatpush.msra.mxu0 %v473
        %950 = vmatpush.msra.mxu0 %v472
        %951 = vmatpush.msra.mxu0 %v471
        %952 = vmatpush.msra.mxu0 %v470
        %953 = vmatpush.msra.mxu0 %v469
        %954 = vmatpush.msra.mxu0 %v468
        %955 = vmatpush.msra.mxu0 %v467
        %956 = vmatpush.msra.mxu0 %v466
        %957 = vmatpush.msra.mxu0 %v465
        %958 = vmatpush.msra.mxu0 %v464
        %959 = vmatpush.msra.mxu0 %v463
        %960 = vmatpush.msra.mxu0 %v462
        %961 = vmatpush.msra.mxu0 %v461
        %962 = vmatpush.msra.mxu0 %v460
        %963 = vmatpush.msra.mxu0 %v459
        %964 = vmatpush.msra.mxu0 %v458
        %965 = vmatmul.f32.gmra.mxu0 %v947
        %v966 = vpop.f32.mrf.mxu0
        %v967 = vadd.f32 %v516, %v966
        %968 = vmatmul.f32.gmra.mxu0 %v948
        %v969 = vpop.f32.mrf.mxu0
        %v970 = vadd.f32 %v516, %v969
        %971 = vdwg.mxu0
        %vm972 = vcmp.gt.f32.partialorder %v967, 0.0
        %vm973 = vcmp.gt.f32.partialorder %v970, 0.0
        %v974 = vmul.f32 %v967, 0.01
        %v975 = vmul.f32 %v970, 0.01
        %v976 = vsel %vm972, %v967, %v974
        %v977 = vsel %vm973, %v970, %v975
        %v978 = vsel %vm547, %v976, 0.0
        %v979 = vsel %vm549, %v977, 0.0
        %v980 = vadd.f32 %v978, %v979
        %981 = vadd.xlane.f32.xlu0 %v980
        %v982 = vpop.xlane.xlu0 %981
        %v983 = vrot.slane %v982, 4
        %v984 = vadd.f32 %v982, %v983
        %v985 = vrot.slane %v984, 2
        %v986 = vadd.f32 %v984, %v985
        %v987 = vrot.slane %v986, 1
        %v988 = vadd.f32 %v986, %v987
        %s989 = vtos %v988
        %v990 = vrcp.pop 704.0
        %v991 = vmul.f32 704.0, %v990
        %v992 = vsub.f32 1.0, %v991
        %v993 = vmul.f32 %v990, %v992
        %v994 = vadd.f32 %v990, %v993
        %vm995 = vweird.f32 %v990
        %v996 = vsel %vm995, %v990, %v994
        %s997 = vtos %v996
        %s998 = smul.f32 %s989, %s997
        %v999 = vstv %s998
        %v1000 = vsub.f32 %v976, %v999
        %v1001 = vsub.f32 %v977, %v999
        %v1002 = vmul.f32 %v1000, %v1000
        %v1003 = vmul.f32 %v1001, %v1001
        %v1004 = vsel %vm547, %v1002, 0.0
        %v1005 = vsel %vm549, %v1003, 0.0
        %v1006 = vadd.f32 %v1004, %v1005
        %1007 = vadd.xlane.f32.xlu0 %v1006
        %v1008 = vpop.xlane.xlu0 %1007
        %v1009 = vrot.slane %v1008, 4
        %v1010 = vadd.f32 %v1008, %v1009
        %v1011 = vrot.slane %v1010, 2
        %v1012 = vadd.f32 %v1010, %v1011
        %v1013 = vrot.slane %v1012, 1
        %v1014 = vadd.f32 %v1012, %v1013
        %s1015 = vtos %v1014
        %v1016 = vrcp.pop 704.0
        %v1017 = vmul.f32 704.0, %v1016
        %v1018 = vsub.f32 1.0, %v1017
        %v1019 = vmul.f32 %v1016, %v1018
        %v1020 = vadd.f32 %v1016, %v1019
        %vm1021 = vweird.f32 %v1016
        %v1022 = vsel %vm1021, %v1016, %v1020
        %s1023 = vtos %v1022
        %s1024 = smul.f32 %s1015, %s1023
        %s1025 = sadd.f32 %s1024, 1e-05
        %v1026 = vstv %s1025
        %v1027 = vrsqrt.pop %v1026
        %v1028 = vmul.f32 %v1027, %v1026
        %v1029 = vmul.f32 %v1028, %v1027
        %v1030 = vmul.f32 0.5, %v1029
        %v1031 = vsub.f32 1.5, %v1030
        %v1032 = vmul.f32 %v1027, %v1031
        %vm1033 = vweird.f32 %v1026
        %vm1034 = vweird.f32 %v1027
        %vm1035 = vmor %vm1033, %vm1034
        %v1036 = vsel %vm1035, %v1027, %v1032
        %s1037 = vtos %v1036
        %v1038 = vstv %s1037
        %v1039 = vmul.f32 %v1000, %v1038
        %v1040 = vmul.f32 %v1001, %v1038
        %v1041 = vmul.f32 %v1039, %v475
        %v1042 = vmul.f32 %v1040, %v476
        %v1043 = vadd.f32 %v1041, %v477
        %v1044 = vadd.f32 %v1042, %v478
        %v1045 = vld [vmem:[%s449] sm:$0xff]
        %v1046 = vld [vmem:[%s449 + $0x8] sm:$0xff]
        %v1047 = vld [vmem:[%s449 + $0x10] sm:$0xff]
        %v1048 = vld [vmem:[%s449 + $0x18] sm:$0xff]
        %v1049 = vld [vmem:[%s449 + $0x20] sm:$0xff]
        %v1050 = vld [vmem:[%s449 + $0x28] sm:$0xff]
        %v1051 = vld [vmem:[%s449 + $0x30] sm:$0xff]
        %v1052 = vld [vmem:[%s449 + $0x38] sm:$0xff]
        %v1053 = vld [vmem:[%s624] sm:$0xff]
        %v1054 = vld [vmem:[%s624 + $0x8] sm:$0xff]
        %v1055 = vld [vmem:[%s624 + $0x10] sm:$0xff]
        %v1056 = vld [vmem:[%s624 + $0x18] sm:$0xff]
        %v1057 = vld [vmem:[%s624 + $0x20] sm:$0xff]
        %v1058 = vld [vmem:[%s624 + $0x28] sm:$0xff]
        %v1059 = vld [vmem:[%s624 + $0x30] sm:$0xff]
        %v1060 = vld [vmem:[%s624 + $0x38] sm:$0xff]
        %v1062 = vrot.slane %v1043, 1
        %v1063 = vsel %vm547, %v1062, 0
        %1065 = vmatpush.msra.mxu0 0.0
        %1066 = vmatpush.msra.mxu0 0.0
        %1067 = vmatpush.msra.mxu0 0.0
        %1068 = vmatpush.msra.mxu0 0.0
        %1069 = vmatpush.msra.mxu0 0.0
        %1070 = vmatpush.msra.mxu0 0.0
        %1071 = vmatpush.msra.mxu0 0.0
        %1072 = vmatpush.msra.mxu0 0.0
        %1073 = vmatpush.msra.mxu0 %v1060
        %1074 = vmatpush.msra.mxu0 %v1059
        %1075 = vmatpush.msra.mxu0 %v1058
        %1076 = vmatpush.msra.mxu0 %v1057
        %1077 = vmatpush.msra.mxu0 %v1056
        %1078 = vmatpush.msra.mxu0 %v1055
        %1079 = vmatpush.msra.mxu0 %v1054
        %1080 = vmatpush.msra.mxu0 %v1053
        %1081 = vmatmul.f32.gmra.mxu0 %v1063
        %v1082 = vpop.f32.mrf.mxu0
        %v1083 = vadd.f32 0.0, %v1082
        %1084 = vdwg.mxu0
        %v1085 = vsel %vm547, %v1043, 0
        %1087 = vmatpush.msra.mxu0 0.0
        %1088 = vmatpush.msra.mxu0 0.0
        %1089 = vmatpush.msra.mxu0 0.0
        %1090 = vmatpush.msra.mxu0 0.0
        %1091 = vmatpush.msra.mxu0 0.0
        %1092 = vmatpush.msra.mxu0 0.0
        %1093 = vmatpush.msra.mxu0 0.0
        %1094 = vmatpush.msra.mxu0 0.0
        %1095 = vmatpush.msra.mxu0 %v1052
        %1096 = vmatpush.msra.mxu0 %v1051
        %1097 = vmatpush.msra.mxu0 %v1050
        %1098 = vmatpush.msra.mxu0 %v1049
        %1099 = vmatpush.msra.mxu0 %v1048
        %1100 = vmatpush.msra.mxu0 %v1047
        %1101 = vmatpush.msra.mxu0 %v1046
        %1102 = vmatpush.msra.mxu0 %v1045
        %1103 = vmatmul.f32.gmra.mxu0 %v1085
        %v1104 = vpop.f32.mrf.mxu0
        %v1105 = vadd.f32 %v1083, %v1104
        %1106 = vdwg.mxu0
        %v1107 = vld [vmem:[%s679] sm:$0xff]
        %v1108 = vld [vmem:[%s679 + $0x8] sm:$0xff]
        %v1109 = vld [vmem:[%s679 + $0x10] sm:$0xff]
        %v1110 = vld [vmem:[%s679 + $0x18] sm:$0xff]
        %v1111 = vld [vmem:[%s679 + $0x20] sm:$0xff]
        %v1112 = vld [vmem:[%s679 + $0x28] sm:$0xff]
        %v1113 = vld [vmem:[%s679 + $0x30] sm:$0xff]
        %v1114 = vld [vmem:[%s679 + $0x38] sm:$0xff]
        %v1115 = vrot.slane %v1043, 2
        %v1116 = vsel %vm547, %v1115, 0
        %1118 = vmatpush.msra.mxu0 0.0
        %1119 = vmatpush.msra.mxu0 0.0
        %1120 = vmatpush.msra.mxu0 0.0
        %1121 = vmatpush.msra.mxu0 0.0
        %1122 = vmatpush.msra.mxu0 0.0
        %1123 = vmatpush.msra.mxu0 0.0
        %1124 = vmatpush.msra.mxu0 0.0
        %1125 = vmatpush.msra.mxu0 0.0
        %1126 = vmatpush.msra.mxu0 %v1114
        %1127 = vmatpush.msra.mxu0 %v1113
        %1128 = vmatpush.msra.mxu0 %v1112
        %1129 = vmatpush.msra.mxu0 %v1111
        %1130 = vmatpush.msra.mxu0 %v1110
        %1131 = vmatpush.msra.mxu0 %v1109
        %1132 = vmatpush.msra.mxu0 %v1108
        %1133 = vmatpush.msra.mxu0 %v1107
        %1134 = vmatmul.f32.gmra.mxu0 %v1116
        %v1135 = vpop.f32.mrf.mxu0
        %v1136 = vadd.f32 0.0, %v1135
        %1137 = vdwg.mxu0
        %v1138 = vadd.f32 %v1105, %v1136
        %v1139 = vld [vmem:[%s712] sm:$0xff]
        %v1140 = vld [vmem:[%s712 + $0x8] sm:$0xff]
        %v1141 = vld [vmem:[%s712 + $0x10] sm:$0xff]
        %v1142 = vld [vmem:[%s712 + $0x18] sm:$0xff]
        %v1143 = vld [vmem:[%s712 + $0x20] sm:$0xff]
        %v1144 = vld [vmem:[%s712 + $0x28] sm:$0xff]
        %v1145 = vld [vmem:[%s712 + $0x30] sm:$0xff]
        %v1146 = vld [vmem:[%s712 + $0x38] sm:$0xff]
        %v1147 = vrot.slane %v1043, 3
        %v1148 = vsel %vm547, %v1147, 0
        %1150 = vmatpush.msra.mxu0 0.0
        %1151 = vmatpush.msra.mxu0 0.0
        %1152 = vmatpush.msra.mxu0 0.0
        %1153 = vmatpush.msra.mxu0 0.0
        %1154 = vmatpush.msra.mxu0 0.0
        %1155 = vmatpush.msra.mxu0 0.0
        %1156 = vmatpush.msra.mxu0 0.0
        %1157 = vmatpush.msra.mxu0 0.0
        %1158 = vmatpush.msra.mxu0 %v1146
        %1159 = vmatpush.msra.mxu0 %v1145
        %1160 = vmatpush.msra.mxu0 %v1144
        %1161 = vmatpush.msra.mxu0 %v1143
        %1162 = vmatpush.msra.mxu0 %v1142
        %1163 = vmatpush.msra.mxu0 %v1141
        %1164 = vmatpush.msra.mxu0 %v1140
        %1165 = vmatpush.msra.mxu0 %v1139
        %1166 = vmatmul.f32.gmra.mxu0 %v1148
        %v1167 = vpop.f32.mrf.mxu0
        %v1168 = vadd.f32 0.0, %v1167
        %1169 = vdwg.mxu0
        %v1170 = vadd.f32 %v1138, %v1168
        %v1171 = vld [vmem:[%s745] sm:$0xff]
        %v1172 = vld [vmem:[%s745 + $0x8] sm:$0xff]
        %v1173 = vld [vmem:[%s745 + $0x10] sm:$0xff]
        %v1174 = vld [vmem:[%s745 + $0x18] sm:$0xff]
        %v1175 = vld [vmem:[%s745 + $0x20] sm:$0xff]
        %v1176 = vld [vmem:[%s745 + $0x28] sm:$0xff]
        %v1177 = vld [vmem:[%s745 + $0x30] sm:$0xff]
        %v1178 = vld [vmem:[%s745 + $0x38] sm:$0xff]
        %v1179 = vrot.slane %v1043, 4
        %v1180 = vsel %vm547, %v1179, 0
        %1182 = vmatpush.msra.mxu0 0.0
        %1183 = vmatpush.msra.mxu0 0.0
        %1184 = vmatpush.msra.mxu0 0.0
        %1185 = vmatpush.msra.mxu0 0.0
        %1186 = vmatpush.msra.mxu0 0.0
        %1187 = vmatpush.msra.mxu0 0.0
        %1188 = vmatpush.msra.mxu0 0.0
        %1189 = vmatpush.msra.mxu0 0.0
        %1190 = vmatpush.msra.mxu0 %v1178
        %1191 = vmatpush.msra.mxu0 %v1177
        %1192 = vmatpush.msra.mxu0 %v1176
        %1193 = vmatpush.msra.mxu0 %v1175
        %1194 = vmatpush.msra.mxu0 %v1174
        %1195 = vmatpush.msra.mxu0 %v1173
        %1196 = vmatpush.msra.mxu0 %v1172
        %1197 = vmatpush.msra.mxu0 %v1171
        %1198 = vmatmul.f32.gmra.mxu0 %v1180
        %v1199 = vpop.f32.mrf.mxu0
        %v1200 = vadd.f32 0.0, %v1199
        %1201 = vdwg.mxu0
        %v1202 = vadd.f32 %v1170, %v1200
        %v1203 = vld [vmem:[%s778] sm:$0xff]
        %v1204 = vld [vmem:[%s778 + $0x8] sm:$0xff]
        %v1205 = vld [vmem:[%s778 + $0x10] sm:$0xff]
        %v1206 = vld [vmem:[%s778 + $0x18] sm:$0xff]
        %v1207 = vld [vmem:[%s778 + $0x20] sm:$0xff]
        %v1208 = vld [vmem:[%s778 + $0x28] sm:$0xff]
        %v1209 = vld [vmem:[%s778 + $0x30] sm:$0xff]
        %v1210 = vld [vmem:[%s778 + $0x38] sm:$0xff]
        %v1212 = vrot.slane %v1043, 5
        %v1213 = vrot.slane %v1044, 5
        %v1214 = vsel %vm788, %v1212, %v1213
        %v1215 = vsel %vm547, %v1214, 0
        %1217 = vmatpush.msra.mxu0 0.0
        %1218 = vmatpush.msra.mxu0 0.0
        %1219 = vmatpush.msra.mxu0 0.0
        %1220 = vmatpush.msra.mxu0 0.0
        %1221 = vmatpush.msra.mxu0 0.0
        %1222 = vmatpush.msra.mxu0 0.0
        %1223 = vmatpush.msra.mxu0 0.0
        %1224 = vmatpush.msra.mxu0 0.0
        %1225 = vmatpush.msra.mxu0 %v1210
        %1226 = vmatpush.msra.mxu0 %v1209
        %1227 = vmatpush.msra.mxu0 %v1208
        %1228 = vmatpush.msra.mxu0 %v1207
        %1229 = vmatpush.msra.mxu0 %v1206
        %1230 = vmatpush.msra.mxu0 %v1205
        %1231 = vmatpush.msra.mxu0 %v1204
        %1232 = vmatpush.msra.mxu0 %v1203
        %1233 = vmatmul.f32.gmra.mxu0 %v1215
        %v1234 = vpop.f32.mrf.mxu0
        %v1235 = vadd.f32 0.0, %v1234
        %1236 = vdwg.mxu0
        %v1237 = vadd.f32 %v1202, %v1235
        %v1238 = vld [vmem:[%s815] sm:$0xff]
        %v1239 = vld [vmem:[%s815 + $0x8] sm:$0xff]
        %v1240 = vld [vmem:[%s815 + $0x10] sm:$0xff]
        %v1241 = vld [vmem:[%s815 + $0x18] sm:$0xff]
        %v1242 = vld [vmem:[%s815 + $0x20] sm:$0xff]
        %v1243 = vld [vmem:[%s815 + $0x28] sm:$0xff]
        %v1244 = vld [vmem:[%s815 + $0x30] sm:$0xff]
        %v1245 = vld [vmem:[%s815 + $0x38] sm:$0xff]
        %v1246 = vrot.slane %v1043, 6
        %v1247 = vrot.slane %v1044, 6
        %v1248 = vsel %vm824, %v1246, %v1247
        %v1249 = vsel %vm547, %v1248, 0
        %1251 = vmatpush.msra.mxu0 0.0
        %1252 = vmatpush.msra.mxu0 0.0
        %1253 = vmatpush.msra.mxu0 0.0
        %1254 = vmatpush.msra.mxu0 0.0
        %1255 = vmatpush.msra.mxu0 0.0
        %1256 = vmatpush.msra.mxu0 0.0
        %1257 = vmatpush.msra.mxu0 0.0
        %1258 = vmatpush.msra.mxu0 0.0
        %1259 = vmatpush.msra.mxu0 %v1245
        %1260 = vmatpush.msra.mxu0 %v1244
        %1261 = vmatpush.msra.mxu0 %v1243
        %1262 = vmatpush.msra.mxu0 %v1242
        %1263 = vmatpush.msra.mxu0 %v1241
        %1264 = vmatpush.msra.mxu0 %v1240
        %1265 = vmatpush.msra.mxu0 %v1239
        %1266 = vmatpush.msra.mxu0 %v1238
        %1267 = vmatmul.f32.gmra.mxu0 %v1249
        %v1268 = vpop.f32.mrf.mxu0
        %v1269 = vadd.f32 0.0, %v1268
        %1270 = vdwg.mxu0
        %v1271 = vadd.f32 %v1237, %v1269
        %v1272 = vld [vmem:[%s851] sm:$0xff]
        %v1273 = vld [vmem:[%s851 + $0x8] sm:$0xff]
        %v1274 = vld [vmem:[%s851 + $0x10] sm:$0xff]
        %v1275 = vld [vmem:[%s851 + $0x18] sm:$0xff]
        %v1276 = vld [vmem:[%s851 + $0x20] sm:$0xff]
        %v1277 = vld [vmem:[%s851 + $0x28] sm:$0xff]
        %v1278 = vld [vmem:[%s851 + $0x30] sm:$0xff]
        %v1279 = vld [vmem:[%s851 + $0x38] sm:$0xff]
        %v1280 = vrot.slane %v1043, 7
        %v1281 = vrot.slane %v1044, 7
        %v1282 = vsel %vm860, %v1280, %v1281
        %v1283 = vsel %vm547, %v1282, 0
        %1285 = vmatpush.msra.mxu0 0.0
        %1286 = vmatpush.msra.mxu0 0.0
        %1287 = vmatpush.msra.mxu0 0.0
        %1288 = vmatpush.msra.mxu0 0.0
        %1289 = vmatpush.msra.mxu0 0.0
        %1290 = vmatpush.msra.mxu0 0.0
        %1291 = vmatpush.msra.mxu0 0.0
        %1292 = vmatpush.msra.mxu0 0.0
        %1293 = vmatpush.msra.mxu0 %v1279
        %1294 = vmatpush.msra.mxu0 %v1278
        %1295 = vmatpush.msra.mxu0 %v1277
        %1296 = vmatpush.msra.mxu0 %v1276
        %1297 = vmatpush.msra.mxu0 %v1275
        %1298 = vmatpush.msra.mxu0 %v1274
        %1299 = vmatpush.msra.mxu0 %v1273
        %1300 = vmatpush.msra.mxu0 %v1272
        %1301 = vmatmul.f32.gmra.mxu0 %v1283
        %v1302 = vpop.f32.mrf.mxu0
        %v1303 = vadd.f32 0.0, %v1302
        %1304 = vdwg.mxu0
        %v1305 = vadd.f32 %v1271, %v1303
        %v1306 = vadd.f32 %v1305, %v888
        %vm1307 = vcmp.gt.f32.partialorder %v1306, 0.0
        %v1308 = vmul.f32 %v1306, 0.01
        %v1309 = vsel %vm1307, %v1306, %v1308
        %1310 = vmatpush.msra.mxu0 %v510
        %1311 = vmatpush.msra.mxu0 %v508
        %1312 = vmatpush.msra.mxu0 %v506
        %1313 = vmatpush.msra.mxu0 %v504
        %1314 = vmatpush.msra.mxu0 %v502
        %1315 = vmatpush.msra.mxu0 %v500
        %1316 = vmatpush.msra.mxu0 %v498
        %1317 = vmatpush.msra.mxu0 %v496
        %1318 = vmatpush.msra.mxu0 %v494
        %1319 = vmatpush.msra.mxu0 %v492
        %1320 = vmatpush.msra.mxu0 %v490
        %1321 = vmatpush.msra.mxu0 %v488
        %1322 = vmatpush.msra.mxu0 %v486
        %1323 = vmatpush.msra.mxu0 %v484
        %1324 = vmatpush.msra.mxu0 %v482
        %1325 = vmatpush.msra.mxu0 %v480
        %1326 = vmatmul.f32.gmra.mxu0 %v1309
        %v1327 = vpop.f32.mrf.mxu0
        %v1328 = vadd.f32 %v895, %v1327
        %1329 = vdwg.mxu0
        %1330 = vmatpush.msra.mxu0 %v511
        %1331 = vmatpush.msra.mxu0 %v509
        %1332 = vmatpush.msra.mxu0 %v507
        %1333 = vmatpush.msra.mxu0 %v505
        %1334 = vmatpush.msra.mxu0 %v503
        %1335 = vmatpush.msra.mxu0 %v501
        %1336 = vmatpush.msra.mxu0 %v499
        %1337 = vmatpush.msra.mxu0 %v497
        %1338 = vmatpush.msra.mxu0 %v495
        %1339 = vmatpush.msra.mxu0 %v493
        %1340 = vmatpush.msra.mxu0 %v491
        %1341 = vmatpush.msra.mxu0 %v489
        %1342 = vmatpush.msra.mxu0 %v487
        %1343 = vmatpush.msra.mxu0 %v485
        %1344 = vmatpush.msra.mxu0 %v483
        %1345 = vmatpush.msra.mxu0 %v481
        %1346 = vmatmul.f32.gmra.mxu0 %v1309
        %v1347 = vpop.f32.mrf.mxu0
        %v1348 = vadd.f32 %v896, %v1347
        %1349 = vdwg.mxu0
        %v1352 = vrot.slane %v1348, 4
        %v1353 = vsel %vm942, %v1328, %v1352
        %s1355 = scalar_lea.vmem %s457, 8
        %1356 = vst [vmem:[%s1355] sm:$0xff] %v1353
        %p1357 = scmp.lt.s32.totalorder %s21, 1
        %s1358 = scalar_select %p1357, %s21, 1
        %s1359 = smul.addr %s1358, 4
        %s1360 = smul.addr %s1359, 4
        %s1361 = scalar_lea.vmem %s9, %s1360
        // Predicated region
        $region61: #{forward.3} parent=55 // pred_check
          %p1362 = pneg %p263
        $region62: #{forward.3} parent=55 // pred_check_branch
          %1364 = sbr.rel (%p1362) target = $region64
        $region63: #{forward.3} parent=55 // pred_region
          _
        $region64: #{forward.3} parent=55 // pred_fallthru
          _
      $region56: #{forward.3} parent=5 // pred_fallthru
        _
      %p1365 = scmp.le.s32.totalorder 2, %s16
      // Predicated region
      $region65: #{forward.3} parent=5 // pred_check
        %p1366 = pneg %p1365
      $region66: #{forward.3} parent=5 // pred_check_branch
        %1368 = sbr.rel (%p1366) target = $region68
      $region67: #{forward.3} parent=5 // pred_region
        %s1369 = ssub.s32 %s16, 2
        // Predicated region
        $region69: #{forward.3} parent=67 // pred_check
          %p1370 = pneg %p269
        $region70: #{forward.3} parent=67 // pred_check_branch
          %1372 = sbr.rel (%p1370) target = $region72
        $region71: #{forward.3} parent=67 // pred_region
          %p1373 = scmp.lt.s32.totalorder %s22, 1
          %s1374 = scalar_select %p1373, %s22, 1
          %s1375 = smul.addr %s1374, 4
          %s1376 = smul.addr %s1375, 4
          %s1377 = scalar_lea.vmem %s9, %s1376
        $region72: #{forward.3} parent=67 // pred_fallthru
          _
      $region68: #{forward.3} parent=5 // pred_fallthru
        _
    $region6: #{forward.3} parent=1 // loop_footer
      %s20 = sadd.s32 1, %s16
    $region7: #{forward.3} parent=1 // loop_footer_branch
      %15 = sbr.rel target = $region3
    $region8: #{forward.3} parent=1 // loop_exit
      _
    %1378 = vsyncpa [#allocation3], 1
    %s1379 = scalar_lea.sflag [#allocation3], 1
    %1380 = vsyncpa %s1379, 1

</llo_original>
